<compile_context>
chip_gen: v6e
topology: v6e:2x2x1
jax: 0.10.0
libtpu: 0.0.40
codegen_flags: <defaults>
</compile_context>

<pallas_src>
import functools

import jax
import jax.numpy as jnp
from jax import lax
from jax.experimental import pallas as pl
from jax.experimental.pallas import tpu as pltpu

EPS = 1e-5                 # InstanceNorm3d default eps
NEG_SLOPE = 0.01           # LeakyReLU negative_slope
_MXU_MIN_CIN = 32          # use the MXU only when the contraction is big enough
_RES_TILE_TARGET = 65536   # ~1-2 MiB x tiles in the resident path
_MAX_RES_TILES = 16        # resident finalize loop is statically unrolled


def _round_up(a, b):
    return -(-a // b) * b


@functools.lru_cache(maxsize=None)
def _vmem_caps():
    """Return (vmem_limit_bytes for CompilerParams, usable tile budget in bytes)."""
    phys = 64 * 1024 * 1024                       # conservative default (v7x: 64 MiB)
    try:
        phys = int(pltpu.get_tpu_info().vmem_capacity_bytes)
    except Exception:
        pass
    phys = max(32 * 1024 * 1024, min(phys, 128 * 1024 * 1024))
    limit = min(int(phys * 0.75), phys - (8 << 20))   # 48 MiB (v7x) / 96 MiB (v5e/v6e)
    budget = int(limit * 0.80)                        # headroom for compiler temps
    return limit, budget


# --------------------------------------------------------------------------- kernels

def _conv1x1(x, w, b=None):
    """Pointwise channel mix on a [C_in, S_tile] f32 tile: w @ x (+ b).

    Tiny channel counts -> VPU broadcast-FMAs (keeps the MXU out of a 4x4
    contraction); large channel counts -> real MXU matmul.
    """
    c_in = x.shape[0]
    if c_in >= _MXU_MIN_CIN:
        y = jnp.dot(w, x, preferred_element_type=jnp.float32)
        return y if b is None else y + b
    y = w[:, 0:1] * x[0:1, :]
    for c in range(1, c_in):                       # static unroll, C is tiny
        y = y + w[:, c:c + 1] * x[c:c + 1, :]
    return y if b is None else y + b


def _leaky_relu(y):
    # valid for 0 < slope < 1: one mul + one max (no compare/select)
    return jnp.maximum(y, NEG_SLOPE * y)


def _sigmoid(z):
    # sigmoid(z) = 0.5*tanh(z/2) + 0.5 : tanh runs on the EUP slot (no VPU divide)
    return 0.5 * jnp.tanh(0.5 * z) + 0.5


def _make_resident_kernel(n_s, s_tile, s_true, eps):
    """Single-pass kernel: conv1 tiles stay resident in a VMEM slab per sample."""
    inv_s = 1.0 / float(s_true)

    def kernel(x_ref, w1_ref, gamma_ref, beta_ref, w2_ref, b2_ref,
               o_ref, y_buf, acc_sum, acc_sq):
        s = pl.program_id(1)

        @pl.when(s == 0)
        def _():
            acc_sum[...] = jnp.zeros_like(acc_sum)
            acc_sq[...] = jnp.zeros_like(acc_sq)

        x = x_ref[...].astype(jnp.float32)                     # [C_in, S_tile]
        yc = _conv1x1(x, w1_ref[...])                          # w1 @ x (bias cancels)
        acc_sum[...] += jnp.sum(yc, axis=-1, keepdims=True)
        acc_sq[...] += jnp.sum(yc * yc, axis=-1, keepdims=True)
        y_buf[s] = yc                                          # keep tile VMEM-resident

        @pl.when(s == n_s - 1)
        def _():
            m1 = acc_sum[...] * inv_s                          # E[w1@x]   (padding = 0)
            var = jnp.maximum(acc_sq[...] * inv_s - m1 * m1, 0.0)
            scale = gamma_ref[...] * lax.rsqrt(var + eps)      # [C_out, 1]
            shift = beta_ref[...] - scale * m1                 # b1 cancels analytically
            w2 = w2_ref[...]
            b2 = b2_ref[...]
            for t in range(n_s):                               # static unroll
                yn = y_buf[t] * scale + shift                  # InstanceNorm + affine
                yn = _leaky_relu(yn)
                z = _conv1x1(yn, w2, b2)                       # conv2
                o_ref[:, pl.ds(t * s_tile, s_tile)] = _sigmoid(z).astype(o_ref.dtype)

    return kernel


def _make_stats_kernel(n_s, s_true, eps):
    """Streaming pass 1: per-sample folded conv1 params (w1_eff, b_eff)."""
    inv_s = 1.0 / float(s_true)

    def kernel(x_ref, w1_ref, gamma_ref, beta_ref, w1e_ref, be_ref,
               acc_sum, acc_sq):
        s = pl.program_id(1)

        @pl.when(s == 0)
        def _():
            acc_sum[...] = jnp.zeros_like(acc_sum)
            acc_sq[...] = jnp.zeros_like(acc_sq)

        x = x_ref[...].astype(jnp.float32)
        yc = _conv1x1(x, w1_ref[...])                          # bias-free conv1
        acc_sum[...] += jnp.sum(yc, axis=-1, keepdims=True)
        acc_sq[...] += jnp.sum(yc * yc, axis=-1, keepdims=True)

        @pl.when(s == n_s - 1)
        def _():
            m1 = acc_sum[...] * inv_s
            var = jnp.maximum(acc_sq[...] * inv_s - m1 * m1, 0.0)
            scale = gamma_ref[...] * lax.rsqrt(var + eps)
            w1e_ref[...] = scale * w1_ref[...]                 # fold norm into conv1
            be_ref[...] = beta_ref[...] - scale * m1

    return kernel


def _apply_kernel(x_ref, w1e_ref, be_ref, w2_ref, b2_ref, o_ref):
    """Streaming pass 2: folded conv1 -> LeakyReLU -> conv2 -> sigmoid."""
    x = x_ref[...].astype(jnp.float32)
    y = _conv1x1(x, w1e_ref[...], be_ref[...])                 # conv1 + InstanceNorm
    y = _leaky_relu(y)
    z = _conv1x1(y, w2_ref[...], b2_ref[...])                  # conv2
    o_ref[...] = _sigmoid(z).astype(o_ref.dtype)


# --------------------------------------------------------------------------- wrappers

def _prep(x, w1, gamma, beta, w2, b2, N, C_in, C_out, S, S_pad):
    xf = x.reshape(N, C_in, S)
    if S_pad > S:
        xf = jnp.pad(xf, ((0, 0), (0, 0), (0, S_pad - S)))
    w1f = w1.reshape(C_out, C_in).astype(jnp.float32)
    w2f = w2.reshape(C_out, C_out).astype(jnp.float32)
    gc = gamma.reshape(C_out, 1).astype(jnp.float32)
    bc = beta.reshape(C_out, 1).astype(jnp.float32)
    b2c = b2.reshape(C_out, 1).astype(jnp.float32)
    return xf, w1f, w2f, gc, bc, b2c


def _run_resident(x, w1, gamma, beta, w2, b2, dims, S_tile, n_s, vmem_limit):
    N, C_in, C_out, D, H, W, S = dims
    S_pad = S_tile * n_s
    xf, w1f, w2f, gc, bc, b2c = _prep(x, w1, gamma, beta, w2, b2,
                                      N, C_in, C_out, S, S_pad)

    x_spec = pl.BlockSpec((pl.Squeezed(), C_in, S_tile), lambda n, s: (n, 0, s))
    w1_spec = pl.BlockSpec((C_out, C_in), lambda n, s: (0, 0))
    w2_spec = pl.BlockSpec((C_out, C_out), lambda n, s: (0, 0))
    col_spec = pl.BlockSpec((C_out, 1), lambda n, s: (0, 0))
    out_spec = pl.BlockSpec((pl.Squeezed(), C_out, S_pad), lambda n, s: (n, 0, 0))

    out = pl.pallas_call(
        _make_resident_kernel(n_s, S_tile, S, EPS),
        out_shape=jax.ShapeDtypeStruct((N, C_out, S_pad), x.dtype),
        grid_spec=pltpu.PrefetchScalarGridSpec(
            num_scalar_prefetch=0,
            grid=(N, n_s),
            in_specs=[x_spec, w1_spec, col_spec, col_spec, w2_spec, col_spec],
            out_specs=out_spec,
            scratch_shapes=[pltpu.VMEM((n_s, C_out, S_tile), jnp.float32),
                            pltpu.VMEM((C_out, 1), jnp.float32),
                            pltpu.VMEM((C_out, 1), jnp.float32)],
        ),
        compiler_params=pltpu.CompilerParams(
            dimension_semantics=("parallel", "arbitrary"),
            vmem_limit_bytes=vmem_limit),
    )(xf, w1f, gc, bc, w2f, b2c)

    if S_pad > S:
        out = out[:, :, :S]
    return out.reshape(N, C_out, D, H, W)


def _run_streaming(x, w1, gamma, beta, w2, b2, dims, S_tile, n_s, vmem_limit):
    N, C_in, C_out, D, H, W, S = dims
    S_pad = S_tile * n_s
    xf, w1f, w2f, gc, bc, b2c = _prep(x, w1, gamma, beta, w2, b2,
                                      N, C_in, C_out, S, S_pad)

    x_spec = pl.BlockSpec((pl.Squeezed(), C_in, S_tile), lambda n, s: (n, 0, s))
    w1_spec = pl.BlockSpec((C_out, C_in), lambda n, s: (0, 0))
    w2_spec = pl.BlockSpec((C_out, C_out), lambda n, s: (0, 0))
    col_spec = pl.BlockSpec((C_out, 1), lambda n, s: (0, 0))
    nc1_spec = pl.BlockSpec((pl.Squeezed(), C_out, 1), lambda n, s: (n, 0, 0))
    ncc_spec = pl.BlockSpec((pl.Squeezed(), C_out, C_in), lambda n, s: (n, 0, 0))

    # pass 1: streaming InstanceNorm stats -> per-sample folded conv1 params
    w1e, be = pl.pallas_call(
        _make_stats_kernel(n_s, S, EPS),
        out_shape=(jax.ShapeDtypeStruct((N, C_out, C_in), jnp.float32),
                   jax.ShapeDtypeStruct((N, C_out, 1), jnp.float32)),
        grid_spec=pltpu.PrefetchScalarGridSpec(
            num_scalar_prefetch=0,
            grid=(N, n_s),
            in_specs=[x_spec, w1_spec, col_spec, col_spec],
            out_specs=[ncc_spec, nc1_spec],
            scratch_shapes=[pltpu.VMEM((C_out, 1), jnp.float32),
                            pltpu.VMEM((C_out, 1), jnp.float32)],
        ),
        compiler_params=pltpu.CompilerParams(
            dimension_semantics=("parallel", "arbitrary"),
            vmem_limit_bytes=vmem_limit),
    )(xf, w1f, gc, bc)

    # pass 2: folded conv1 -> LeakyReLU -> conv2 -> sigmoid (lane-dense output tiles)
    out = pl.pallas_call(
        _apply_kernel,
        out_shape=jax.ShapeDtypeStruct((N, C_out, S_pad), x.dtype),
        grid_spec=pltpu.PrefetchScalarGridSpec(
            num_scalar_prefetch=0,
            grid=(N, n_s),
            in_specs=[x_spec, ncc_spec, nc1_spec, w2_spec, col_spec],
            out_specs=pl.BlockSpec((pl.Squeezed(), C_out, S_tile),
                                   lambda n, s: (n, 0, s)),
        ),
        compiler_params=pltpu.CompilerParams(
            dimension_semantics=("parallel", "parallel"),
            vmem_limit_bytes=vmem_limit),
    )(xf, w1e, be, w2f, b2c)

    if S_pad > S:
        out = out[:, :, :S]
    return out.reshape(N, C_out, D, H, W)


def spatial_attention_block(x, w1, b1, gamma, beta, w2, b2, *,
                            max_tile_lanes=None, force_streaming=False):
    """x: [N, C_in, D, H, W] (f32 or bf16) -> [N, C_out, D, H, W] in x.dtype.

    b1 is accepted for API parity with the PyTorch module, but it cancels analytically
    inside InstanceNorm, so it never influences the output.
    """
    del b1
    N, C_in, D, H, W = x.shape
    C_out = w1.shape[0]
    S = D * H * W
    dims = (N, C_in, C_out, D, H, W, S)

    vmem_limit, vmem_budget = _vmem_caps()
    in_b = jnp.dtype(x.dtype).itemsize
    out_b = in_b
    cip = _round_up(C_in, 8)                     # sublane padding in VMEM
    cop = _round_up(C_out, 8)

    lane_cap = None
    if max_tile_lanes is not None:
        lane_cap = max(128, (int(max_tile_lanes) // 128) * 128)

    S_128 = _round_up(S, 128)

    # ---------------- resident (single-pass) dispatch ----------------
    if not force_streaming:
        tgt = _RES_TILE_TARGET if lane_cap is None else min(_RES_TILE_TARGET, lane_cap)
        n_s = min(_MAX_RES_TILES, max(1, pl.cdiv(S_128, tgt)))
        S_tile = _round_up(pl.cdiv(S, n_s), 128)
        S_pad = S_tile * n_s
        resident_bytes = (n_s * cop * S_tile * 4        # y_buf slab (f32)
                          + 2 * cop * S_pad * out_b     # double-buffered output block
                          + 2 * cip * S_tile * in_b     # double-buffered x tile
                          + 6 * cop * S_tile * 4)       # live f32 temporaries
        if resident_bytes <= vmem_budget:
            return _run_resident(x, w1, gamma, beta, w2, b2, dims,
                                 S_tile, n_s, vmem_limit)

    # ---------------- streaming (two-pass) fallback ----------------
    per_lane = max(2 * cip * in_b + 2 * cop * out_b + 6 * cop * 4,   # pass 2 peak
                   2 * cip * in_b + 4 * cop * 4)                     # pass 1 peak
    cap = max(128, (vmem_budget // per_lane) // 128 * 128)
    if lane_cap is not None:
        cap = min(cap, lane_cap)
    n_s = max(1, pl.cdiv(S_128, cap))
    S_tile = _round_up(pl.cdiv(S, n_s), 128)
    return _run_streaming(x, w1, gamma, beta, w2, b2, dims, S_tile, n_s, vmem_limit)


# --------------------------------------------------------------------------- reference

def reference(x, w1, b1, gamma, beta, w2, b2):
    """Pure-JAX reference mirroring the PyTorch forward (NCDHW, f32)."""
    x = x.astype(jnp.float32)
    C_out = w1.shape[0]
    w1m = w1.reshape(C_out, -1)
    w2m = w2.reshape(C_out, -1)
    y = jnp.einsum('oc,ncdhw->nodhw', w1m, x) + b1.reshape(1, -1, 1, 1, 1)
    mean = jnp.mean(y, axis=(2, 3, 4), keepdims=True)
    var = jnp.mean((y - mean) ** 2, axis=(2, 3, 4), keepdims=True)
    y = (y - mean) / jnp.sqrt(var + EPS)
    y = gamma.reshape(1, -1, 1, 1, 1) * y + beta.reshape(1, -1, 1, 1, 1)
    y = jnp.where(y >= 0, y, NEG_SLOPE * y)
    z = jnp.einsum('oc,ncdhw->nodhw', w2m, y) + b2.reshape(1, -1, 1, 1, 1)
    return jax.nn.sigmoid(z)


if __name__ == "__main__":
    # in_channels == out_channels (required for the module's conv2 to type-check).
    N, C = 2, 4
    D, H, W = 4, 8, 32                        # S = 1024 (128-aligned)

    key = jax.random.PRNGKey(0)
    kx, k1, kb1, kg, kb, k2, kb2, kx2 = jax.random.split(key, 8)

    x = jax.random.normal(kx, (N, C, D, H, W), dtype=jnp.float32)
    w1 = 0.3 * jax.random.normal(k1, (C, C), dtype=jnp.float32)
    b1 = 0.1 * jax.random.normal(kb1, (C,), dtype=jnp.float32)
    gamma = 1.0 + 0.1 * jax.random.normal(kg, (C,), dtype=jnp.float32)
    beta = 0.1 * jax.random.normal(kb, (C,), dtype=jnp.float32)
    w2 = 0.3 * jax.random.normal(k2, (C, C), dtype=jnp.float32)
    b2 = 0.1 * jax.random.normal(kb2, (C,), dtype=jnp.float32)

    ref = reference(x, w1, b1, gamma, beta, w2, b2)

    # 1) resident single-pass path, forced multi-tile (4 S-tiles / sample).
    out = jax.block_until_ready(
        spatial_attention_block(x, w1, b1, gamma, beta, w2, b2, max_tile_lanes=256))
    assert out.shape == (N, C, D, H, W)
    assert jnp.allclose(out, ref, atol=2e-5, rtol=1e-4), "resident path mismatch"

    # 2) streaming two-pass fallback path (forced, multi-tile).
    out_s = jax.block_until_ready(
        spatial_attention_block(x, w1, b1, gamma, beta, w2, b2,
                                max_tile_lanes=256, force_streaming=True))
    assert jnp.allclose(out_s, ref, atol=2e-5, rtol=1e-4), "streaming path mismatch"

    # 3) default dispatch (VMEM-budget-sized tiles; single-tile resident at this size).
    out_d = jax.block_until_ready(
        spatial_attention_block(x, w1, b1, gamma, beta, w2, b2))
    assert jnp.allclose(out_d, ref, atol=2e-5, rtol=1e-4), "default path mismatch"

    # 4) non-128-aligned spatial extent -> exercises lane padding (stats stay exact).
    D2, H2, W2 = 5, 6, 11                     # S = 330 -> padded to 384 lanes
    x2 = jax.random.normal(kx2, (N, C, D2, H2, W2), dtype=jnp.float32)
    ref2 = reference(x2, w1, b1, gamma, beta, w2, b2)
    out2s = jax.block_until_ready(
        spatial_attention_block(x2, w1, b1, gamma, beta, w2, b2,
                                max_tile_lanes=128, force_streaming=True))
    assert jnp.allclose(out2s, ref2, atol=2e-5, rtol=1e-4), "padded streaming mismatch"
    out2r = jax.block_until_ready(
        spatial_attention_block(x2, w1, b1, gamma, beta, w2, b2, max_tile_lanes=128))
    assert jnp.allclose(out2r, ref2, atol=2e-5, rtol=1e-4), "padded resident mismatch"

    # 5) bf16 I/O path (halves HBM traffic; internal math stays f32).
    out_bf = jax.block_until_ready(
        spatial_attention_block(x.astype(jnp.bfloat16), w1, b1, gamma, beta, w2, b2))
    assert out_bf.dtype == jnp.bfloat16
    assert jnp.allclose(out_bf.astype(jnp.float32), ref, atol=5e-2, rtol=5e-2), \
        "bf16 path mismatch"

    print("KERNEL_OK")
</pallas_src>

<mosaic_0001>
module attributes {stable_mosaic.version = 11 : i64} {
  func.func @kernel(%arg0: i32, %arg1: i32, %arg2: memref<1x4x256xf32, #tpu.memory_space<vmem>>, %arg3: memref<4x4xf32, #tpu.memory_space<vmem>>, %arg4: memref<4x1xf32, #tpu.memory_space<vmem>>, %arg5: memref<4x1xf32, #tpu.memory_space<vmem>>, %arg6: memref<4x4xf32, #tpu.memory_space<vmem>>, %arg7: memref<4x1xf32, #tpu.memory_space<vmem>>, %arg8: memref<1x4x1024xf32, #tpu.memory_space<vmem>>, %arg9: memref<4x4x256xf32, #tpu.memory_space<vmem>>, %arg10: memref<4x1xf32, #tpu.memory_space<vmem>>, %arg11: memref<4x1xf32, #tpu.memory_space<vmem>>) attributes {dimension_semantics = [#tpu.dimension_semantics<parallel>, #tpu.dimension_semantics<arbitrary>], iteration_bounds = array<i64: 2, 4>, scalar_prefetch = 0 : i64, scratch_operands = 3 : i64, tpu.core_type = #tpu.core_type<tc>, window_params = [{transform_indices = @transform_0, window_bounds = array<i64: 1, 4, 256>}, {pipeline_mode = #tpu.pipeline_mode<synchronous>, transform_indices = @transform_1, window_bounds = array<i64: 4, 4>}, {pipeline_mode = #tpu.pipeline_mode<synchronous>, transform_indices = @transform_2, window_bounds = array<i64: 4, 1>}, {pipeline_mode = #tpu.pipeline_mode<synchronous>, transform_indices = @transform_3, window_bounds = array<i64: 4, 1>}, {pipeline_mode = #tpu.pipeline_mode<synchronous>, transform_indices = @transform_4, window_bounds = array<i64: 4, 4>}, {pipeline_mode = #tpu.pipeline_mode<synchronous>, transform_indices = @transform_5, window_bounds = array<i64: 4, 1>}, {transform_indices = @transform_6, window_bounds = array<i64: 1, 4, 1024>}]} {
    %c0_i32 = arith.constant 0 : i32
    %0 = arith.cmpi eq, %arg1, %c0_i32 : i32
    %1 = arith.extui %0 : i1 to i32
    %c0_i32_0 = arith.constant 0 : i32
    %2 = arith.cmpi ne, %1, %c0_i32_0 : i32
    scf.if %2 {
      %cst_17 = arith.constant 0.000000e+00 : f32
      %47 = vector.broadcast %cst_17 : f32 to vector<4x1xf32>
      %c0_18 = arith.constant 0 : index
      %c0_19 = arith.constant 0 : index
      %48 = vector.load %arg10[%c0_18, %c0_19] : memref<4x1xf32, #tpu.memory_space<vmem>>, vector<4x1xf32>
      tpu.vector_store %arg10[%c0_18, %c0_19], %47 {strides = array<i32>} : memref<4x1xf32, #tpu.memory_space<vmem>>, vector<4x1xf32>,
      %cst_20 = arith.constant 0.000000e+00 : f32
      %49 = vector.broadcast %cst_20 : f32 to vector<4x1xf32>
      %c0_21 = arith.constant 0 : index
      %c0_22 = arith.constant 0 : index
      %50 = vector.load %arg11[%c0_21, %c0_22] : memref<4x1xf32, #tpu.memory_space<vmem>>, vector<4x1xf32>
      tpu.vector_store %arg11[%c0_21, %c0_22], %49 {strides = array<i32>} : memref<4x1xf32, #tpu.memory_space<vmem>>, vector<4x1xf32>,
    } else {
    }
    %c0 = arith.constant 0 : index
    %c0_1 = arith.constant 0 : index
    %c0_2 = arith.constant 0 : index
    %3 = vector.load %arg2[%c0, %c0_1, %c0_2] : memref<1x4x256xf32, #tpu.memory_space<vmem>>, vector<1x4x256xf32>
    %4 = vector.shape_cast %3 : vector<1x4x256xf32> to vector<4x256xf32>
    %c0_3 = arith.constant 0 : index
    %c0_4 = arith.constant 0 : index
    %5 = vector.load %arg3[%c0_3, %c0_4] : memref<4x4xf32, #tpu.memory_space<vmem>>, vector<4x4xf32>
    %6 = vector.extract_strided_slice %5 {offsets = [0, 0], sizes = [4, 1], strides = [1, 1]} : vector<4x4xf32> to vector<4x1xf32>
    %7 = vector.extract_strided_slice %4 {offsets = [0, 0], sizes = [1, 256], strides = [1, 1]} : vector<4x256xf32> to vector<1x256xf32>
    %8 = vector.broadcast %6 : vector<4x1xf32> to vector<4x256xf32>
    %9 = vector.broadcast %7 : vector<1x256xf32> to vector<4x256xf32>
    %10 = arith.mulf %8, %9 : vector<4x256xf32>
    %11 = vector.extract_strided_slice %5 {offsets = [0, 1], sizes = [4, 1], strides = [1, 1]} : vector<4x4xf32> to vector<4x1xf32>
    %12 = vector.extract_strided_slice %4 {offsets = [1, 0], sizes = [1, 256], strides = [1, 1]} : vector<4x256xf32> to vector<1x256xf32>
    %13 = vector.broadcast %11 : vector<4x1xf32> to vector<4x256xf32>
    %14 = vector.broadcast %12 : vector<1x256xf32> to vector<4x256xf32>
    %15 = arith.mulf %13, %14 : vector<4x256xf32>
    %16 = arith.addf %10, %15 : vector<4x256xf32>
    %17 = vector.extract_strided_slice %5 {offsets = [0, 2], sizes = [4, 1], strides = [1, 1]} : vector<4x4xf32> to vector<4x1xf32>
    %18 = vector.extract_strided_slice %4 {offsets = [2, 0], sizes = [1, 256], strides = [1, 1]} : vector<4x256xf32> to vector<1x256xf32>
    %19 = vector.broadcast %17 : vector<4x1xf32> to vector<4x256xf32>
    %20 = vector.broadcast %18 : vector<1x256xf32> to vector<4x256xf32>
    %21 = arith.mulf %19, %20 : vector<4x256xf32>
    %22 = arith.addf %16, %21 : vector<4x256xf32>
    %23 = vector.extract_strided_slice %5 {offsets = [0, 3], sizes = [4, 1], strides = [1, 1]} : vector<4x4xf32> to vector<4x1xf32>
    %24 = vector.extract_strided_slice %4 {offsets = [3, 0], sizes = [1, 256], strides = [1, 1]} : vector<4x256xf32> to vector<1x256xf32>
    %25 = vector.broadcast %23 : vector<4x1xf32> to vector<4x256xf32>
    %26 = vector.broadcast %24 : vector<1x256xf32> to vector<4x256xf32>
    %27 = arith.mulf %25, %26 : vector<4x256xf32>
    %28 = arith.addf %22, %27 : vector<4x256xf32>
    %c0_5 = arith.constant 0 : index
    %c0_6 = arith.constant 0 : index
    %29 = vector.load %arg10[%c0_5, %c0_6] : memref<4x1xf32, #tpu.memory_space<vmem>>, vector<4x1xf32>
    %cst = arith.constant dense<0.000000e+00> : vector<4xf32>
    %30 = vector.multi_reduction <add>, %28, %cst [1] : vector<4x256xf32> to vector<4xf32>
    %31 = vector.shape_cast %30 : vector<4xf32> to vector<4x1xf32>
    %32 = arith.addf %29, %31 : vector<4x1xf32>
    %c0_7 = arith.constant 0 : index
    %c0_8 = arith.constant 0 : index
    %33 = vector.load %arg10[%c0_7, %c0_8] : memref<4x1xf32, #tpu.memory_space<vmem>>, vector<4x1xf32>
    tpu.vector_store %arg10[%c0_7, %c0_8], %32 {strides = array<i32>} : memref<4x1xf32, #tpu.memory_space<vmem>>, vector<4x1xf32>,
    %c0_9 = arith.constant 0 : index
    %c0_10 = arith.constant 0 : index
    %34 = vector.load %arg11[%c0_9, %c0_10] : memref<4x1xf32, #tpu.memory_space<vmem>>, vector<4x1xf32>
    %35 = arith.mulf %28, %28 : vector<4x256xf32>
    %cst_11 = arith.constant dense<0.000000e+00> : vector<4xf32>
    %36 = vector.multi_reduction <add>, %35, %cst_11 [1] : vector<4x256xf32> to vector<4xf32>
    %37 = vector.shape_cast %36 : vector<4xf32> to vector<4x1xf32>
    %38 = arith.addf %34, %37 : vector<4x1xf32>
    %c0_12 = arith.constant 0 : index
    %c0_13 = arith.constant 0 : index
    %39 = vector.load %arg11[%c0_12, %c0_13] : memref<4x1xf32, #tpu.memory_space<vmem>>, vector<4x1xf32>
    tpu.vector_store %arg11[%c0_12, %c0_13], %38 {strides = array<i32>} : memref<4x1xf32, #tpu.memory_space<vmem>>, vector<4x1xf32>,
    %40 = arith.index_cast %arg1 : i32 to index
    %c0_14 = arith.constant 0 : index
    %c0_15 = arith.constant 0 : index
    %41 = vector.load %arg9[%40, %c0_14, %c0_15] : memref<4x4x256xf32, #tpu.memory_space<vmem>>, vector<1x4x256xf32>
    %42 = vector.shape_cast %41 : vector<1x4x256xf32> to vector<4x256xf32>
    %43 = vector.shape_cast %28 : vector<4x256xf32> to vector<1x4x256xf32>
    tpu.vector_store %arg9[%40, %c0_14, %c0_15], %43 {strides = array<i32>} : memref<4x4x256xf32, #tpu.memory_space<vmem>>, vector<1x4x256xf32>,
    %c3_i32 = arith.constant 3 : i32
    %44 = arith.cmpi eq, %arg1, %c3_i32 : i32
    %45 = arith.extui %44 : i1 to i32
    %c0_i32_16 = arith.constant 0 : i32
    %46 = arith.cmpi ne, %45, %c0_i32_16 : i32
    scf.if %46 {
      %c0_17 = arith.constant 0 : index
      %c0_18 = arith.constant 0 : index
      %47 = vector.load %arg10[%c0_17, %c0_18] : memref<4x1xf32, #tpu.memory_space<vmem>>, vector<4x1xf32>
      %cst_19 = arith.constant 9.765625E-4 : f32
      %48 = vector.broadcast %cst_19 : f32 to vector<4x1xf32>
      %49 = arith.mulf %47, %48 : vector<4x1xf32>
      %c0_20 = arith.constant 0 : index
      %c0_21 = arith.constant 0 : index
      %50 = vector.load %arg11[%c0_20, %c0_21] : memref<4x1xf32, #tpu.memory_space<vmem>>, vector<4x1xf32>
      %cst_22 = arith.constant 9.765625E-4 : f32
      %51 = vector.broadcast %cst_22 : f32 to vector<4x1xf32>
      %52 = arith.mulf %50, %51 : vector<4x1xf32>
      %53 = arith.mulf %49, %49 : vector<4x1xf32>
      %54 = arith.subf %52, %53 : vector<4x1xf32>
      %cst_23 = arith.constant 0.000000e+00 : f32
      %55 = vector.broadcast %cst_23 : f32 to vector<4x1xf32>
      %56 = arith.maximumf %54, %55 : vector<4x1xf32>
      %c0_24 = arith.constant 0 : index
      %c0_25 = arith.constant 0 : index
      %57 = vector.load %arg4[%c0_24, %c0_25] : memref<4x1xf32, #tpu.memory_space<vmem>>, vector<4x1xf32>
      %cst_26 = arith.constant 9.99999974E-6 : f32
      %58 = vector.broadcast %cst_26 : f32 to vector<4x1xf32>
      %59 = arith.addf %56, %58 : vector<4x1xf32>
      %60 = math.rsqrt %59 : vector<4x1xf32>
      %61 = arith.mulf %57, %60 : vector<4x1xf32>
      %c0_27 = arith.constant 0 : index
      %c0_28 = arith.constant 0 : index
      %62 = vector.load %arg5[%c0_27, %c0_28] : memref<4x1xf32, #tpu.memory_space<vmem>>, vector<4x1xf32>
      %63 = arith.mulf %61, %49 : vector<4x1xf32>
      %64 = arith.subf %62, %63 : vector<4x1xf32>
      %c0_29 = arith.constant 0 : index
      %c0_30 = arith.constant 0 : index
      %65 = vector.load %arg6[%c0_29, %c0_30] : memref<4x4xf32, #tpu.memory_space<vmem>>, vector<4x4xf32>
      %c0_31 = arith.constant 0 : index
      %c0_32 = arith.constant 0 : index
      %66 = vector.load %arg7[%c0_31, %c0_32] : memref<4x1xf32, #tpu.memory_space<vmem>>, vector<4x1xf32>
      %c0_33 = arith.constant 0 : index
      %c0_34 = arith.constant 0 : index
      %c0_35 = arith.constant 0 : index
      %67 = vector.load %arg9[%c0_33, %c0_34, %c0_35] : memref<4x4x256xf32, #tpu.memory_space<vmem>>, vector<1x4x256xf32>
      %68 = vector.shape_cast %67 : vector<1x4x256xf32> to vector<4x256xf32>
      %69 = vector.broadcast %61 : vector<4x1xf32> to vector<4x256xf32>
      %70 = arith.mulf %68, %69 : vector<4x256xf32>
      %71 = vector.broadcast %64 : vector<4x1xf32> to vector<4x256xf32>
      %72 = arith.addf %70, %71 : vector<4x256xf32>
      %cst_36 = arith.constant 0.00999999977 : f32
      %73 = vector.broadcast %cst_36 : f32 to vector<4x256xf32>
      %74 = arith.mulf %73, %72 : vector<4x256xf32>
      %75 = arith.maximumf %72, %74 : vector<4x256xf32>
      %76 = vector.extract_strided_slice %65 {offsets = [0, 0], sizes = [4, 1], strides = [1, 1]} : vector<4x4xf32> to vector<4x1xf32>
      %77 = vector.extract_strided_slice %75 {offsets = [0, 0], sizes = [1, 256], strides = [1, 1]} : vector<4x256xf32> to vector<1x256xf32>
      %78 = vector.broadcast %76 : vector<4x1xf32> to vector<4x256xf32>
      %79 = vector.broadcast %77 : vector<1x256xf32> to vector<4x256xf32>
      %80 = arith.mulf %78, %79 : vector<4x256xf32>
      %81 = vector.extract_strided_slice %65 {offsets = [0, 1], sizes = [4, 1], strides = [1, 1]} : vector<4x4xf32> to vector<4x1xf32>
      %82 = vector.extract_strided_slice %75 {offsets = [1, 0], sizes = [1, 256], strides = [1, 1]} : vector<4x256xf32> to vector<1x256xf32>
      %83 = vector.broadcast %81 : vector<4x1xf32> to vector<4x256xf32>
      %84 = vector.broadcast %82 : vector<1x256xf32> to vector<4x256xf32>
      %85 = arith.mulf %83, %84 : vector<4x256xf32>
      %86 = arith.addf %80, %85 : vector<4x256xf32>
      %87 = vector.extract_strided_slice %65 {offsets = [0, 2], sizes = [4, 1], strides = [1, 1]} : vector<4x4xf32> to vector<4x1xf32>
      %88 = vector.extract_strided_slice %75 {offsets = [2, 0], sizes = [1, 256], strides = [1, 1]} : vector<4x256xf32> to vector<1x256xf32>
      %89 = vector.broadcast %87 : vector<4x1xf32> to vector<4x256xf32>
      %90 = vector.broadcast %88 : vector<1x256xf32> to vector<4x256xf32>
      %91 = arith.mulf %89, %90 : vector<4x256xf32>
      %92 = arith.addf %86, %91 : vector<4x256xf32>
      %93 = vector.extract_strided_slice %65 {offsets = [0, 3], sizes = [4, 1], strides = [1, 1]} : vector<4x4xf32> to vector<4x1xf32>
      %94 = vector.extract_strided_slice %75 {offsets = [3, 0], sizes = [1, 256], strides = [1, 1]} : vector<4x256xf32> to vector<1x256xf32>
      %95 = vector.broadcast %93 : vector<4x1xf32> to vector<4x256xf32>
      %96 = vector.broadcast %94 : vector<1x256xf32> to vector<4x256xf32>
      %97 = arith.mulf %95, %96 : vector<4x256xf32>
      %98 = arith.addf %92, %97 : vector<4x256xf32>
      %99 = vector.broadcast %66 : vector<4x1xf32> to vector<4x256xf32>
      %100 = arith.addf %98, %99 : vector<4x256xf32>
      %cst_37 = arith.constant 5.000000e-01 : f32
      %101 = vector.broadcast %cst_37 : f32 to vector<4x256xf32>
      %102 = arith.mulf %101, %100 : vector<4x256xf32>
      %103 = math.tanh %102 : vector<4x256xf32>
      %cst_38 = arith.constant 5.000000e-01 : f32
      %104 = vector.broadcast %cst_38 : f32 to vector<4x256xf32>
      %105 = arith.mulf %104, %103 : vector<4x256xf32>
      %cst_39 = arith.constant 5.000000e-01 : f32
      %106 = vector.broadcast %cst_39 : f32 to vector<4x256xf32>
      %107 = arith.addf %105, %106 : vector<4x256xf32>
      %c0_40 = arith.constant 0 : index
      %c0_41 = arith.constant 0 : index
      %c0_42 = arith.constant 0 : index
      %108 = vector.load %arg8[%c0_40, %c0_41, %c0_42] : memref<1x4x1024xf32, #tpu.memory_space<vmem>>, vector<1x4x256xf32>
      %109 = vector.shape_cast %108 : vector<1x4x256xf32> to vector<4x256xf32>
      %110 = vector.shape_cast %107 : vector<4x256xf32> to vector<1x4x256xf32>
      tpu.vector_store %arg8[%c0_40, %c0_41, %c0_42], %110 {strides = array<i32>} : memref<1x4x1024xf32, #tpu.memory_space<vmem>>, vector<1x4x256xf32>,
      %c1 = arith.constant 1 : index
      %c0_43 = arith.constant 0 : index
      %c0_44 = arith.constant 0 : index
      %111 = vector.load %arg9[%c1, %c0_43, %c0_44] : memref<4x4x256xf32, #tpu.memory_space<vmem>>, vector<1x4x256xf32>
      %112 = vector.shape_cast %111 : vector<1x4x256xf32> to vector<4x256xf32>
      %113 = vector.broadcast %61 : vector<4x1xf32> to vector<4x256xf32>
      %114 = arith.mulf %112, %113 : vector<4x256xf32>
      %115 = vector.broadcast %64 : vector<4x1xf32> to vector<4x256xf32>
      %116 = arith.addf %114, %115 : vector<4x256xf32>
      %cst_45 = arith.constant 0.00999999977 : f32
      %117 = vector.broadcast %cst_45 : f32 to vector<4x256xf32>
      %118 = arith.mulf %117, %116 : vector<4x256xf32>
      %119 = arith.maximumf %116, %118 : vector<4x256xf32>
      %120 = vector.extract_strided_slice %65 {offsets = [0, 0], sizes = [4, 1], strides = [1, 1]} : vector<4x4xf32> to vector<4x1xf32>
      %121 = vector.extract_strided_slice %119 {offsets = [0, 0], sizes = [1, 256], strides = [1, 1]} : vector<4x256xf32> to vector<1x256xf32>
      %122 = vector.broadcast %120 : vector<4x1xf32> to vector<4x256xf32>
      %123 = vector.broadcast %121 : vector<1x256xf32> to vector<4x256xf32>
      %124 = arith.mulf %122, %123 : vector<4x256xf32>
      %125 = vector.extract_strided_slice %65 {offsets = [0, 1], sizes = [4, 1], strides = [1, 1]} : vector<4x4xf32> to vector<4x1xf32>
      %126 = vector.extract_strided_slice %119 {offsets = [1, 0], sizes = [1, 256], strides = [1, 1]} : vector<4x256xf32> to vector<1x256xf32>
      %127 = vector.broadcast %125 : vector<4x1xf32> to vector<4x256xf32>
      %128 = vector.broadcast %126 : vector<1x256xf32> to vector<4x256xf32>
      %129 = arith.mulf %127, %128 : vector<4x256xf32>
      %130 = arith.addf %124, %129 : vector<4x256xf32>
      %131 = vector.extract_strided_slice %65 {offsets = [0, 2], sizes = [4, 1], strides = [1, 1]} : vector<4x4xf32> to vector<4x1xf32>
      %132 = vector.extract_strided_slice %119 {offsets = [2, 0], sizes = [1, 256], strides = [1, 1]} : vector<4x256xf32> to vector<1x256xf32>
      %133 = vector.broadcast %131 : vector<4x1xf32> to vector<4x256xf32>
      %134 = vector.broadcast %132 : vector<1x256xf32> to vector<4x256xf32>
      %135 = arith.mulf %133, %134 : vector<4x256xf32>
      %136 = arith.addf %130, %135 : vector<4x256xf32>
      %137 = vector.extract_strided_slice %65 {offsets = [0, 3], sizes = [4, 1], strides = [1, 1]} : vector<4x4xf32> to vector<4x1xf32>
      %138 = vector.extract_strided_slice %119 {offsets = [3, 0], sizes = [1, 256], strides = [1, 1]} : vector<4x256xf32> to vector<1x256xf32>
      %139 = vector.broadcast %137 : vector<4x1xf32> to vector<4x256xf32>
      %140 = vector.broadcast %138 : vector<1x256xf32> to vector<4x256xf32>
      %141 = arith.mulf %139, %140 : vector<4x256xf32>
      %142 = arith.addf %136, %141 : vector<4x256xf32>
      %143 = vector.broadcast %66 : vector<4x1xf32> to vector<4x256xf32>
      %144 = arith.addf %142, %143 : vector<4x256xf32>
      %cst_46 = arith.constant 5.000000e-01 : f32
      %145 = vector.broadcast %cst_46 : f32 to vector<4x256xf32>
      %146 = arith.mulf %145, %144 : vector<4x256xf32>
      %147 = math.tanh %146 : vector<4x256xf32>
      %cst_47 = arith.constant 5.000000e-01 : f32
      %148 = vector.broadcast %cst_47 : f32 to vector<4x256xf32>
      %149 = arith.mulf %148, %147 : vector<4x256xf32>
      %cst_48 = arith.constant 5.000000e-01 : f32
      %150 = vector.broadcast %cst_48 : f32 to vector<4x256xf32>
      %151 = arith.addf %149, %150 : vector<4x256xf32>
      %c0_49 = arith.constant 0 : index
      %c0_50 = arith.constant 0 : index
      %c256 = arith.constant 256 : index
      %152 = vector.load %arg8[%c0_49, %c0_50, %c256] : memref<1x4x1024xf32, #tpu.memory_space<vmem>>, vector<1x4x256xf32>
      %153 = vector.shape_cast %152 : vector<1x4x256xf32> to vector<4x256xf32>
      %154 = vector.shape_cast %151 : vector<4x256xf32> to vector<1x4x256xf32>
      tpu.vector_store %arg8[%c0_49, %c0_50, %c256], %154 {strides = array<i32>} : memref<1x4x1024xf32, #tpu.memory_space<vmem>>, vector<1x4x256xf32>,
      %c2 = arith.constant 2 : index
      %c0_51 = arith.constant 0 : index
      %c0_52 = arith.constant 0 : index
      %155 = vector.load %arg9[%c2, %c0_51, %c0_52] : memref<4x4x256xf32, #tpu.memory_space<vmem>>, vector<1x4x256xf32>
      %156 = vector.shape_cast %155 : vector<1x4x256xf32> to vector<4x256xf32>
      %157 = vector.broadcast %61 : vector<4x1xf32> to vector<4x256xf32>
      %158 = arith.mulf %156, %157 : vector<4x256xf32>
      %159 = vector.broadcast %64 : vector<4x1xf32> to vector<4x256xf32>
      %160 = arith.addf %158, %159 : vector<4x256xf32>
      %cst_53 = arith.constant 0.00999999977 : f32
      %161 = vector.broadcast %cst_53 : f32 to vector<4x256xf32>
      %162 = arith.mulf %161, %160 : vector<4x256xf32>
      %163 = arith.maximumf %160, %162 : vector<4x256xf32>
      %164 = vector.extract_strided_slice %65 {offsets = [0, 0], sizes = [4, 1], strides = [1, 1]} : vector<4x4xf32> to vector<4x1xf32>
      %165 = vector.extract_strided_slice %163 {offsets = [0, 0], sizes = [1, 256], strides = [1, 1]} : vector<4x256xf32> to vector<1x256xf32>
      %166 = vector.broadcast %164 : vector<4x1xf32> to vector<4x256xf32>
      %167 = vector.broadcast %165 : vector<1x256xf32> to vector<4x256xf32>
      %168 = arith.mulf %166, %167 : vector<4x256xf32>
      %169 = vector.extract_strided_slice %65 {offsets = [0, 1], sizes = [4, 1], strides = [1, 1]} : vector<4x4xf32> to vector<4x1xf32>
      %170 = vector.extract_strided_slice %163 {offsets = [1, 0], sizes = [1, 256], strides = [1, 1]} : vector<4x256xf32> to vector<1x256xf32>
      %171 = vector.broadcast %169 : vector<4x1xf32> to vector<4x256xf32>
      %172 = vector.broadcast %170 : vector<1x256xf32> to vector<4x256xf32>
      %173 = arith.mulf %171, %172 : vector<4x256xf32>
      %174 = arith.addf %168, %173 : vector<4x256xf32>
      %175 = vector.extract_strided_slice %65 {offsets = [0, 2], sizes = [4, 1], strides = [1, 1]} : vector<4x4xf32> to vector<4x1xf32>
      %176 = vector.extract_strided_slice %163 {offsets = [2, 0], sizes = [1, 256], strides = [1, 1]} : vector<4x256xf32> to vector<1x256xf32>
      %177 = vector.broadcast %175 : vector<4x1xf32> to vector<4x256xf32>
      %178 = vector.broadcast %176 : vector<1x256xf32> to vector<4x256xf32>
      %179 = arith.mulf %177, %178 : vector<4x256xf32>
      %180 = arith.addf %174, %179 : vector<4x256xf32>
      %181 = vector.extract_strided_slice %65 {offsets = [0, 3], sizes = [4, 1], strides = [1, 1]} : vector<4x4xf32> to vector<4x1xf32>
      %182 = vector.extract_strided_slice %163 {offsets = [3, 0], sizes = [1, 256], strides = [1, 1]} : vector<4x256xf32> to vector<1x256xf32>
      %183 = vector.broadcast %181 : vector<4x1xf32> to vector<4x256xf32>
      %184 = vector.broadcast %182 : vector<1x256xf32> to vector<4x256xf32>
      %185 = arith.mulf %183, %184 : vector<4x256xf32>
      %186 = arith.addf %180, %185 : vector<4x256xf32>
      %187 = vector.broadcast %66 : vector<4x1xf32> to vector<4x256xf32>
      %188 = arith.addf %186, %187 : vector<4x256xf32>
      %cst_54 = arith.constant 5.000000e-01 : f32
      %189 = vector.broadcast %cst_54 : f32 to vector<4x256xf32>
      %190 = arith.mulf %189, %188 : vector<4x256xf32>
      %191 = math.tanh %190 : vector<4x256xf32>
      %cst_55 = arith.constant 5.000000e-01 : f32
      %192 = vector.broadcast %cst_55 : f32 to vector<4x256xf32>
      %193 = arith.mulf %192, %191 : vector<4x256xf32>
      %cst_56 = arith.constant 5.000000e-01 : f32
      %194 = vector.broadcast %cst_56 : f32 to vector<4x256xf32>
      %195 = arith.addf %193, %194 : vector<4x256xf32>
      %c0_57 = arith.constant 0 : index
      %c0_58 = arith.constant 0 : index
      %c512 = arith.constant 512 : index
      %196 = vector.load %arg8[%c0_57, %c0_58, %c512] : memref<1x4x1024xf32, #tpu.memory_space<vmem>>, vector<1x4x256xf32>
      %197 = vector.shape_cast %196 : vector<1x4x256xf32> to vector<4x256xf32>
      %198 = vector.shape_cast %195 : vector<4x256xf32> to vector<1x4x256xf32>
      tpu.vector_store %arg8[%c0_57, %c0_58, %c512], %198 {strides = array<i32>} : memref<1x4x1024xf32, #tpu.memory_space<vmem>>, vector<1x4x256xf32>,
      %c3 = arith.constant 3 : index
      %c0_59 = arith.constant 0 : index
      %c0_60 = arith.constant 0 : index
      %199 = vector.load %arg9[%c3, %c0_59, %c0_60] : memref<4x4x256xf32, #tpu.memory_space<vmem>>, vector<1x4x256xf32>
      %200 = vector.shape_cast %199 : vector<1x4x256xf32> to vector<4x256xf32>
      %201 = vector.broadcast %61 : vector<4x1xf32> to vector<4x256xf32>
      %202 = arith.mulf %200, %201 : vector<4x256xf32>
      %203 = vector.broadcast %64 : vector<4x1xf32> to vector<4x256xf32>
      %204 = arith.addf %202, %203 : vector<4x256xf32>
      %cst_61 = arith.constant 0.00999999977 : f32
      %205 = vector.broadcast %cst_61 : f32 to vector<4x256xf32>
      %206 = arith.mulf %205, %204 : vector<4x256xf32>
      %207 = arith.maximumf %204, %206 : vector<4x256xf32>
      %208 = vector.extract_strided_slice %65 {offsets = [0, 0], sizes = [4, 1], strides = [1, 1]} : vector<4x4xf32> to vector<4x1xf32>
      %209 = vector.extract_strided_slice %207 {offsets = [0, 0], sizes = [1, 256], strides = [1, 1]} : vector<4x256xf32> to vector<1x256xf32>
      %210 = vector.broadcast %208 : vector<4x1xf32> to vector<4x256xf32>
      %211 = vector.broadcast %209 : vector<1x256xf32> to vector<4x256xf32>
      %212 = arith.mulf %210, %211 : vector<4x256xf32>
      %213 = vector.extract_strided_slice %65 {offsets = [0, 1], sizes = [4, 1], strides = [1, 1]} : vector<4x4xf32> to vector<4x1xf32>
      %214 = vector.extract_strided_slice %207 {offsets = [1, 0], sizes = [1, 256], strides = [1, 1]} : vector<4x256xf32> to vector<1x256xf32>
      %215 = vector.broadcast %213 : vector<4x1xf32> to vector<4x256xf32>
      %216 = vector.broadcast %214 : vector<1x256xf32> to vector<4x256xf32>
      %217 = arith.mulf %215, %216 : vector<4x256xf32>
      %218 = arith.addf %212, %217 : vector<4x256xf32>
      %219 = vector.extract_strided_slice %65 {offsets = [0, 2], sizes = [4, 1], strides = [1, 1]} : vector<4x4xf32> to vector<4x1xf32>
      %220 = vector.extract_strided_slice %207 {offsets = [2, 0], sizes = [1, 256], strides = [1, 1]} : vector<4x256xf32> to vector<1x256xf32>
      %221 = vector.broadcast %219 : vector<4x1xf32> to vector<4x256xf32>
      %222 = vector.broadcast %220 : vector<1x256xf32> to vector<4x256xf32>
      %223 = arith.mulf %221, %222 : vector<4x256xf32>
      %224 = arith.addf %218, %223 : vector<4x256xf32>
      %225 = vector.extract_strided_slice %65 {offsets = [0, 3], sizes = [4, 1], strides = [1, 1]} : vector<4x4xf32> to vector<4x1xf32>
      %226 = vector.extract_strided_slice %207 {offsets = [3, 0], sizes = [1, 256], strides = [1, 1]} : vector<4x256xf32> to vector<1x256xf32>
      %227 = vector.broadcast %225 : vector<4x1xf32> to vector<4x256xf32>
      %228 = vector.broadcast %226 : vector<1x256xf32> to vector<4x256xf32>
      %229 = arith.mulf %227, %228 : vector<4x256xf32>
      %230 = arith.addf %224, %229 : vector<4x256xf32>
      %231 = vector.broadcast %66 : vector<4x1xf32> to vector<4x256xf32>
      %232 = arith.addf %230, %231 : vector<4x256xf32>
      %cst_62 = arith.constant 5.000000e-01 : f32
      %233 = vector.broadcast %cst_62 : f32 to vector<4x256xf32>
      %234 = arith.mulf %233, %232 : vector<4x256xf32>
      %235 = math.tanh %234 : vector<4x256xf32>
      %cst_63 = arith.constant 5.000000e-01 : f32
      %236 = vector.broadcast %cst_63 : f32 to vector<4x256xf32>
      %237 = arith.mulf %236, %235 : vector<4x256xf32>
      %cst_64 = arith.constant 5.000000e-01 : f32
      %238 = vector.broadcast %cst_64 : f32 to vector<4x256xf32>
      %239 = arith.addf %237, %238 : vector<4x256xf32>
      %c0_65 = arith.constant 0 : index
      %c0_66 = arith.constant 0 : index
      %c768 = arith.constant 768 : index
      %240 = vector.load %arg8[%c0_65, %c0_66, %c768] : memref<1x4x1024xf32, #tpu.memory_space<vmem>>, vector<1x4x256xf32>
      %241 = vector.shape_cast %240 : vector<1x4x256xf32> to vector<4x256xf32>
      %242 = vector.shape_cast %239 : vector<4x256xf32> to vector<1x4x256xf32>
      tpu.vector_store %arg8[%c0_65, %c0_66, %c768], %242 {strides = array<i32>} : memref<1x4x1024xf32, #tpu.memory_space<vmem>>, vector<1x4x256xf32>,
    } else {
    }
    return
  }
  func.func @transform_0(%arg0: i32, %arg1: i32) -> (i32, i32, i32) {
    %c0_i32 = arith.constant 0 : i32
    %c0_i32_0 = arith.constant 0 : i32
    return %arg0, %c0_i32, %arg1 : i32, i32, i32
  }
  func.func @transform_1(%arg0: i32, %arg1: i32) -> (i32, i32) {
    %c0_i32 = arith.constant 0 : i32
    %c0_i32_0 = arith.constant 0 : i32
    %c0_i32_1 = arith.constant 0 : i32
    return %c0_i32, %c0_i32_0 : i32, i32
  }
  func.func @transform_2(%arg0: i32, %arg1: i32) -> (i32, i32) {
    %c0_i32 = arith.constant 0 : i32
    %c0_i32_0 = arith.constant 0 : i32
    %c0_i32_1 = arith.constant 0 : i32
    return %c0_i32, %c0_i32_0 : i32, i32
  }
  func.func @transform_3(%arg0: i32, %arg1: i32) -> (i32, i32) {
    %c0_i32 = arith.constant 0 : i32
    %c0_i32_0 = arith.constant 0 : i32
    %c0_i32_1 = arith.constant 0 : i32
    return %c0_i32, %c0_i32_0 : i32, i32
  }
  func.func @transform_4(%arg0: i32, %arg1: i32) -> (i32, i32) {
    %c0_i32 = arith.constant 0 : i32
    %c0_i32_0 = arith.constant 0 : i32
    %c0_i32_1 = arith.constant 0 : i32
    return %c0_i32, %c0_i32_0 : i32, i32
  }
  func.func @transform_5(%arg0: i32, %arg1: i32) -> (i32, i32) {
    %c0_i32 = arith.constant 0 : i32
    %c0_i32_0 = arith.constant 0 : i32
    %c0_i32_1 = arith.constant 0 : i32
    return %c0_i32, %c0_i32_0 : i32, i32
  }
  func.func @transform_6(%arg0: i32, %arg1: i32) -> (i32, i32, i32) {
    %c0_i32 = arith.constant 0 : i32
    %c0_i32_0 = arith.constant 0 : i32
    %c0_i32_1 = arith.constant 0 : i32
    return %arg0, %c0_i32, %c0_i32_0 : i32, i32, i32
  }
}

</mosaic_0001>

<llo_original>
// kernel: tpu_custom_call.1
$region0: #{tpu_custom_call.1}
  #allocation0 [shape = 'u32[]', space=smem, size = 0x4, offset = 0x4, fixed_abs, tag = 'smem constant byte address 0x4 - core index']
  #allocation1 [shape = 'u32[144,128]{1,0:T(1,128)}', space=vmem, size = 0x12000, scoped, tag = 'internal scratch']
  #allocation2 [shape = 'f32[4,4,256]{2,1,0:T(4,128)}', space=vmem, size = 0x4000, scoped, tag = 'scratch operand']
  #allocation3 [shape = 'f32[4,1]{1,0:T(4,128)}', space=vmem, size = 0x800, scoped, tag = 'scratch operand']
  #allocation4 [shape = 'f32[4,1]{1,0:T(4,128)}', space=vmem, size = 0x800, scoped, tag = 'scratch operand']
  %s0 = inlined_call_operand.hbm [shape: f32[2,4,1024], index: 0, kind: input, shape index: {}]
  %s1 = inlined_call_operand.vmem [shape: f32[4,4], index: 1, kind: input, shape index: {}]
  %s2 = inlined_call_operand.vmem [shape: f32[4,1], index: 2, kind: input, shape index: {}]
  %s3 = inlined_call_operand.vmem [shape: f32[4,1], index: 3, kind: input, shape index: {}]
  %s4 = inlined_call_operand.vmem [shape: f32[4,4], index: 4, kind: input, shape index: {}]
  %s5 = inlined_call_operand.vmem [shape: f32[4,1], index: 5, kind: input, shape index: {}]
  %s6 = inlined_call_operand.hbm [shape: f32[2,4,1024], index: 6, kind: output, shape index: {}]
  %s7 = sld [smem:[#allocation0]]
  $region69: #{tpu_custom_call.1} parent=0
    _
  %s9 = ssub.s32 1, %s7
  %s10 = scalar_select 0, %s9, %s7
  $region1: #{tpu_custom_call.1} parent=0
    #allocation5 [shape = 'u8[8192]{0}', space=vmem, size = 0x2000, scoped, tag = 'input window, operand 0']
    #allocation6 [shape = 's32[2]{0}', space=sflag, size = 0x8, scoped, tag = 'scoped memory for tpu_custom_call.1']
    #allocation7 [shape = 's32[2]{0}', space=sflag, size = 0x8, scoped, tag = 'scoped memory for tpu_custom_call.1']
    #allocation8 [shape = 'u8[32768]{0}', space=vmem, size = 0x8000, scoped, tag = 'output window, operand 0']
    %11 = vsyncpa [#allocation6], 0
    %s12 = scalar_lea.sflag [#allocation6], 1
    %13 = vsyncpa %s12, 0
    %14 = vsyncpa [#allocation7], 0
    %s15 = scalar_lea.sflag [#allocation7], 1
    %16 = vsyncpa %s15, 0
    loop: start=0, step=1, limit=10
    $region2: #{tpu_custom_call.1} parent=1 // loop_pre_header
      _
    $region3: #{tpu_custom_call.1} parent=1 // loop_header
      %s18 = sphi 0, %s22
      %p19 = scmp.ge.s32.totalorder %s18, 10
      %s25 = sphi 0, %s37
      %s26 = sphi 0, %s33
      %s27 = sphi 0, %s25
      %s28 = sphi 0, %s26
      %s29 = sphi 0, %s27
      %s30 = sphi 0, %s28
      %s42 = sphi 0, %s44
      %s45 = sphi 0, %s42
      %s46 = sphi 0, %s45
      %s62 = sphi 0, %s46
      %s66 = sphi 0, %s66
      %s68 = sphi 0, %s66
      %s69 = sphi 0, %s68
      %s83 = sphi 0, %s69
      %s87 = sphi 0, %s87
      %s89 = sphi 0, %s87
      %s90 = sphi 0, %s89
      %s104 = sphi 0, %s90
      %s108 = sphi 0, %s108
      %s110 = sphi 0, %s108
      %s111 = sphi 0, %s110
      %s125 = sphi 0, %s111
      %s129 = sphi 0, %s129
      %s131 = sphi 0, %s129
      %s132 = sphi 0, %s131
      %s146 = sphi 0, %s132
      %s150 = sphi 0, %s150
      %s152 = sphi 0, %s150
      %s153 = sphi 0, %s152
      %s167 = sphi 0, %s153
      %s173 = sphi 0, %s175
      %s176 = sphi 0, %s173
      %s177 = sphi 0, %s176
      %s193 = sphi 0, %s177
    $region4: #{tpu_custom_call.1} parent=1 // loop_header_branch
      %21 = sbr.rel (%p19) target = $region8
    $region5: #{tpu_custom_call.1} parent=1 // loop_body
      %s23 = ssub.s32 %s18, 1
      %s24 = ssub.s32 %s18, 2
      %s31 = sadd.s32 1, %s26
      %p32 = scmp.ge.s32.totalorder %s31, 4
      %s33 = scalar_select %p32, 0, %s31
      %s34 = sadd.s32 1, %s25
      %s35 = scalar_select %p32, %s34, %s25
      %p36 = scmp.ge.s32.totalorder %s35, 2
      %s37 = scalar_select %p36, 0, %s35
      %s38 = ssub.s32 %s25, %s37
      %s39 = ssub.s32 %s26, %s33
      %s40 = sor.u32 %s38, %s39
      %p41 = scmp.eq.s32.totalorder %s40, 0
      %s43 = sadd.s32 %s42, 1
      %s44 = scalar_select %p41, %s42, %s43
      %p47 = pneg %p41
      %p48 = scmp.eq.s32.totalorder %s18, 7
      %p49 = por %p47, %p48
      %p50 = scmp.ne.s32.totalorder %s42, %s45
      %p51 = scmp.eq.s32.totalorder %s18, 0
      %p52 = por %p50, %p51
      %p53 = scmp.ne.s32.totalorder %s42, %s45
      %p54 = scmp.eq.s32.totalorder %s23, 7
      %p55 = por %p53, %p54
      %p56 = scmp.ne.s32.totalorder %s45, %s46
      %p57 = scmp.eq.s32.totalorder %s23, 0
      %p58 = por %p56, %p57
      %p59 = scmp.ne.s32.totalorder %s45, %s46
      %p60 = scmp.eq.s32.totalorder %s24, 7
      %p61 = por %p59, %p60
      %p63 = scmp.ne.s32.totalorder %s46, %s62
      %p64 = scmp.eq.s32.totalorder %s24, 0
      %p65 = por %p63, %p64
      %s67 = sadd.s32 %s66, 1
      %p70 = scmp.eq.s32.totalorder %s18, 7
      %p71 = scmp.ne.s32.totalorder %s66, %s68
      %p72 = scmp.eq.s32.totalorder %s18, 0
      %p73 = por %p71, %p72
      %p74 = scmp.ne.s32.totalorder %s66, %s68
      %p75 = scmp.eq.s32.totalorder %s23, 7
      %p76 = por %p74, %p75
      %p77 = scmp.ne.s32.totalorder %s68, %s69
      %p78 = scmp.eq.s32.totalorder %s23, 0
      %p79 = por %p77, %p78
      %p80 = scmp.ne.s32.totalorder %s68, %s69
      %p81 = scmp.eq.s32.totalorder %s24, 7
      %p82 = por %p80, %p81
      %p84 = scmp.ne.s32.totalorder %s69, %s83
      %p85 = scmp.eq.s32.totalorder %s24, 0
      %p86 = por %p84, %p85
      %s88 = sadd.s32 %s87, 1
      %p91 = scmp.eq.s32.totalorder %s18, 7
      %p92 = scmp.ne.s32.totalorder %s87, %s89
      %p93 = scmp.eq.s32.totalorder %s18, 0
      %p94 = por %p92, %p93
      %p95 = scmp.ne.s32.totalorder %s87, %s89
      %p96 = scmp.eq.s32.totalorder %s23, 7
      %p97 = por %p95, %p96
      %p98 = scmp.ne.s32.totalorder %s89, %s90
      %p99 = scmp.eq.s32.totalorder %s23, 0
      %p100 = por %p98, %p99
      %p101 = scmp.ne.s32.totalorder %s89, %s90
      %p102 = scmp.eq.s32.totalorder %s24, 7
      %p103 = por %p101, %p102
      %p105 = scmp.ne.s32.totalorder %s90, %s104
      %p106 = scmp.eq.s32.totalorder %s24, 0
      %p107 = por %p105, %p106
      %s109 = sadd.s32 %s108, 1
      %p112 = scmp.eq.s32.totalorder %s18, 7
      %p113 = scmp.ne.s32.totalorder %s108, %s110
      %p114 = scmp.eq.s32.totalorder %s18, 0
      %p115 = por %p113, %p114
      %p116 = scmp.ne.s32.totalorder %s108, %s110
      %p117 = scmp.eq.s32.totalorder %s23, 7
      %p118 = por %p116, %p117
      %p119 = scmp.ne.s32.totalorder %s110, %s111
      %p120 = scmp.eq.s32.totalorder %s23, 0
      %p121 = por %p119, %p120
      %p122 = scmp.ne.s32.totalorder %s110, %s111
      %p123 = scmp.eq.s32.totalorder %s24, 7
      %p124 = por %p122, %p123
      %p126 = scmp.ne.s32.totalorder %s111, %s125
      %p127 = scmp.eq.s32.totalorder %s24, 0
      %p128 = por %p126, %p127
      %s130 = sadd.s32 %s129, 1
      %p133 = scmp.eq.s32.totalorder %s18, 7
      %p134 = scmp.ne.s32.totalorder %s129, %s131
      %p135 = scmp.eq.s32.totalorder %s18, 0
      %p136 = por %p134, %p135
      %p137 = scmp.ne.s32.totalorder %s129, %s131
      %p138 = scmp.eq.s32.totalorder %s23, 7
      %p139 = por %p137, %p138
      %p140 = scmp.ne.s32.totalorder %s131, %s132
      %p141 = scmp.eq.s32.totalorder %s23, 0
      %p142 = por %p140, %p141
      %p143 = scmp.ne.s32.totalorder %s131, %s132
      %p144 = scmp.eq.s32.totalorder %s24, 7
      %p145 = por %p143, %p144
      %p147 = scmp.ne.s32.totalorder %s132, %s146
      %p148 = scmp.eq.s32.totalorder %s24, 0
      %p149 = por %p147, %p148
      %s151 = sadd.s32 %s150, 1
      %p154 = scmp.eq.s32.totalorder %s18, 7
      %p155 = scmp.ne.s32.totalorder %s150, %s152
      %p156 = scmp.eq.s32.totalorder %s18, 0
      %p157 = por %p155, %p156
      %p158 = scmp.ne.s32.totalorder %s150, %s152
      %p159 = scmp.eq.s32.totalorder %s23, 7
      %p160 = por %p158, %p159
      %p161 = scmp.ne.s32.totalorder %s152, %s153
      %p162 = scmp.eq.s32.totalorder %s23, 0
      %p163 = por %p161, %p162
      %p164 = scmp.ne.s32.totalorder %s152, %s153
      %p165 = scmp.eq.s32.totalorder %s24, 7
      %p166 = por %p164, %p165
      %p168 = scmp.ne.s32.totalorder %s153, %s167
      %p169 = scmp.eq.s32.totalorder %s24, 0
      %p170 = por %p168, %p169
      %s171 = ssub.s32 %s25, %s37
      %p172 = scmp.eq.s32.totalorder %s171, 0
      %s174 = sadd.s32 %s173, 1
      %s175 = scalar_select %p172, %s173, %s174
      %p178 = pneg %p172
      %p179 = scmp.eq.s32.totalorder %s18, 7
      %p180 = por %p178, %p179
      %p181 = scmp.ne.s32.totalorder %s173, %s176
      %p182 = scmp.eq.s32.totalorder %s18, 0
      %p183 = por %p181, %p182
      %p184 = scmp.ne.s32.totalorder %s173, %s176
      %p185 = scmp.eq.s32.totalorder %s23, 7
      %p186 = por %p184, %p185
      %p187 = scmp.ne.s32.totalorder %s176, %s177
      %p188 = scmp.eq.s32.totalorder %s23, 0
      %p189 = por %p187, %p188
      %p190 = scmp.ne.s32.totalorder %s176, %s177
      %p191 = scmp.eq.s32.totalorder %s24, 7
      %p192 = por %p190, %p191
      %p194 = scmp.ne.s32.totalorder %s177, %s193
      %p195 = scmp.eq.s32.totalorder %s24, 0
      %p196 = por %p194, %p195
      %p197 = scmp.le.s32.totalorder 1, %s18
      %p198 = scmp.lt.s32.totalorder %s18, 9
      %p199 = pnand %p197, %p198
      %p200 = pneg %p199
      // Predicated region
      $region9: #{tpu_custom_call.1} parent=5 // pred_check
        _
      $region10: #{tpu_custom_call.1} parent=5 // pred_check_branch
        %202 = sbr.rel (%p199) target = $region12
      $region11: #{tpu_custom_call.1} parent=5 // pred_region
        %s203 = ssub.s32 %s18, 1
        // Predicated region
        $region13: #{tpu_custom_call.1} parent=11 // pred_check
          %p204 = pneg %p79
        $region14: #{tpu_custom_call.1} parent=11 // pred_check_branch
          %206 = sbr.rel (%p204) target = $region16
        $region15: #{tpu_custom_call.1} parent=11 // pred_region
          _
        $region16: #{tpu_custom_call.1} parent=11 // pred_fallthru
          _
        // Predicated region
        $region17: #{tpu_custom_call.1} parent=11 // pred_check
          %p207 = pneg %p100
        $region18: #{tpu_custom_call.1} parent=11 // pred_check_branch
          %209 = sbr.rel (%p207) target = $region20
        $region19: #{tpu_custom_call.1} parent=11 // pred_region
          _
        $region20: #{tpu_custom_call.1} parent=11 // pred_fallthru
          _
        // Predicated region
        $region21: #{tpu_custom_call.1} parent=11 // pred_check
          %p210 = pneg %p121
        $region22: #{tpu_custom_call.1} parent=11 // pred_check_branch
          %212 = sbr.rel (%p210) target = $region24
        $region23: #{tpu_custom_call.1} parent=11 // pred_region
          _
        $region24: #{tpu_custom_call.1} parent=11 // pred_fallthru
          _
        // Predicated region
        $region25: #{tpu_custom_call.1} parent=11 // pred_check
          %p213 = pneg %p142
        $region26: #{tpu_custom_call.1} parent=11 // pred_check_branch
          %215 = sbr.rel (%p213) target = $region28
        $region27: #{tpu_custom_call.1} parent=11 // pred_region
          _
        $region28: #{tpu_custom_call.1} parent=11 // pred_fallthru
          _
        // Predicated region
        $region29: #{tpu_custom_call.1} parent=11 // pred_check
          %p216 = pneg %p163
        $region30: #{tpu_custom_call.1} parent=11 // pred_check_branch
          %218 = sbr.rel (%p216) target = $region32
        $region31: #{tpu_custom_call.1} parent=11 // pred_region
          _
        $region32: #{tpu_custom_call.1} parent=11 // pred_fallthru
          _
      $region12: #{tpu_custom_call.1} parent=5 // pred_fallthru
        _
      %p219 = scmp.lt.s32.totalorder %s18, 8
      // Predicated region
      $region33: #{tpu_custom_call.1} parent=5 // pred_check
        %p220 = pneg %p219
      $region34: #{tpu_custom_call.1} parent=5 // pred_check_branch
        %222 = sbr.rel (%p220) target = $region36
      $region35: #{tpu_custom_call.1} parent=5 // pred_region
        // Predicated region
        $region37: #{tpu_custom_call.1} parent=35 // pred_check
          %p223 = pneg %p52
        $region38: #{tpu_custom_call.1} parent=35 // pred_check_branch
          %225 = sbr.rel (%p223) target = $region40
        $region39: #{tpu_custom_call.1} parent=35 // pred_region
          %s226 = sand.u32 %s42, 1
          %s227 = scalar_lea.sflag [#allocation6], %s226
          %s228 = sand.u32 %s42, 1
          %s229 = smul.addr %s228, 8
          %s230 = scalar_lea.vmem [#allocation5], %s229
          %s231 = smul.u32 2, %s26
          %s233 = ssub.s32 128, 128
          %234 = vsyncadd %s227, %s233
          %s235 = smul.addr %s25, 8
          %s236 = sadd.s32 %s231, %s235
          %s237 = smul.addr %s236, 64
          %s238 = scalar_lea.hbm %s0, %s237
          %s240 = sshll.u32 %s230, 4
          %s241 = int_to_ptr.vmem [resolvable:$true] %s240
          %243 = dma.hbm_to_vmem [thread:$0]  %s238, 128, %s241, %s227
        $region40: #{tpu_custom_call.1} parent=35 // pred_fallthru
          _
      $region36: #{tpu_custom_call.1} parent=5 // pred_fallthru
        _
      %p244 = scmp.le.s32.totalorder 1, %s18
      %p245 = scmp.lt.s32.totalorder %s18, 9
      %p246 = pnand %p244, %p245
      %p247 = pneg %p246
      // Predicated region
      $region41: #{tpu_custom_call.1} parent=5 // pred_check
        _
      $region42: #{tpu_custom_call.1} parent=5 // pred_check_branch
        %249 = sbr.rel (%p246) target = $region44
      $region43: #{tpu_custom_call.1} parent=5 // pred_region
        %s250 = ssub.s32 %s18, 1
        %s251 = sand.u32 %s45, 1
        %s252 = scalar_lea.sflag [#allocation6], %s251
        %s253 = sand.u32 %s45, 1
        %s254 = smul.addr %s253, 8
        %s255 = scalar_lea.vmem [#allocation5], %s254
        // Predicated region
        $region45: #{tpu_custom_call.1} parent=43 // pred_check
          %p256 = pneg %p58
        $region46: #{tpu_custom_call.1} parent=43 // pred_check_branch
          %258 = sbr.rel (%p256) target = $region48
        $region47: #{tpu_custom_call.1} parent=43 // pred_region
          %259 = dma.done %s252, 128
        $region48: #{tpu_custom_call.1} parent=43 // pred_fallthru
          _
        %s260 = sand.u32 %s45, 1
        %s261 = scalar_lea.sflag [#allocation6], %s260
        %s262 = sand.u32 %s45, 1
        %s263 = smul.addr %s262, 8
        %s264 = scalar_lea.vmem [#allocation5], %s263
        %p265 = pneg %p58
        %p266 = pneg %p55
        %p267 = pneg %p79
        %p268 = pneg %p76
        %p269 = pneg %p100
        %p270 = pneg %p97
        %p271 = pneg %p121
        %p272 = pneg %p118
        %p273 = pneg %p142
        %p274 = pneg %p139
        %p275 = pneg %p163
        %p276 = pneg %p160
        %p277 = pneg %p189
        %p278 = pneg %p186
        %s279 = sand.u32 %s176, 1
        %s280 = scalar_lea.sflag [#allocation7], %s279
        %s281 = sand.u32 %s176, 1
        %s282 = smul.addr %s281, 32
        %s283 = scalar_lea.vmem [#allocation8], %s282
        %s284 = smul.u32 2, %s28
        %p285 = scmp.eq.s32.totalorder %s28, 0
        // Predicated region
        $region49: #{tpu_custom_call.1} parent=43 // pred_check
          %p286 = pneg %p285
        $region50: #{tpu_custom_call.1} parent=43 // pred_check_branch
          %288 = sbr.rel (%p286) target = $region52
        $region51: #{tpu_custom_call.1} parent=43 // pred_region
          %vm289 = vcmask 3072
          %290 = vst.msk [vmem:[#allocation3] sm:$0xf] %vm289, 0.0
          %291 = vst.msk [vmem:[#allocation4] sm:$0xf] %vm289, 0.0
        $region52: #{tpu_custom_call.1} parent=43 // pred_fallthru
          _
        %v292 = vld [vmem:[%s255] sm:$0xff]
        %v293 = vld [vmem:[%s1] sm:$0xf]
        %295 = vset.pattern.permute.xlu0 0
        %296 = vperm.xlu0 %295, %v293
        %v297 = vpop.permute.xlu0 %296
        %v300 = vlaneseq
        %v301 = vshrl.u32 %v300, 7
        %v302 = vsub.s32 0, %v301
        %v303 = vrot.slane %v292, %v302
        %v304 = vlaneseq
        %v305 = vshrl.u32 %v304, 7
        %v306 = vsub.s32 4, %v305
        %v307 = vrot.slane %v292, %v306
        %v310 = vlaneseq
        %v311 = vshrl.u32 %v310, 7
        %v312 = vsub.s32 0, %v311
        %v313 = vrot.slane %v303, %v312
        %v314 = vlaneseq
        %v315 = vshrl.u32 %v314, 7
        %v316 = vsub.s32 0, %v315
        %v317 = vrot.slane %v307, %v316
        %v318 = vmul.f32 %v297, %v313
        %v319 = vmul.f32 %v297, %v317
        %320 = vset.pattern.permute.xlu0 1
        %321 = vperm.xlu0 %320, %v293
        %v322 = vpop.permute.xlu0 %321
        %v324 = vlaneseq
        %v325 = vshrl.u32 %v324, 7
        %v326 = vsub.s32 1, %v325
        %v327 = vrot.slane %v292, %v326
        %v328 = vlaneseq
        %v329 = vshrl.u32 %v328, 7
        %v330 = vsub.s32 5, %v329
        %v331 = vrot.slane %v292, %v330
        %v334 = vlaneseq
        %v335 = vshrl.u32 %v334, 7
        %v336 = vsub.s32 1, %v335
        %v337 = vrot.slane %v327, %v336
        %v338 = vlaneseq
        %v339 = vshrl.u32 %v338, 7
        %v340 = vsub.s32 1, %v339
        %v341 = vrot.slane %v331, %v340
        %v342 = vmul.f32 %v322, %v337
        %v343 = vmul.f32 %v322, %v341
        %v344 = vadd.f32 %v318, %v342
        %v345 = vadd.f32 %v319, %v343
        %346 = vset.pattern.permute.xlu0 2
        %347 = vperm.xlu0 %346, %v293
        %v348 = vpop.permute.xlu0 %347
        %v350 = vlaneseq
        %v351 = vshrl.u32 %v350, 7
        %v352 = vsub.s32 2, %v351
        %v353 = vrot.slane %v292, %v352
        %v354 = vlaneseq
        %v355 = vshrl.u32 %v354, 7
        %v356 = vsub.s32 6, %v355
        %v357 = vrot.slane %v292, %v356
        %v360 = vlaneseq
        %v361 = vshrl.u32 %v360, 7
        %v362 = vsub.s32 2, %v361
        %v363 = vrot.slane %v353, %v362
        %v364 = vlaneseq
        %v365 = vshrl.u32 %v364, 7
        %v366 = vsub.s32 2, %v365
        %v367 = vrot.slane %v357, %v366
        %v368 = vmul.f32 %v348, %v363
        %v369 = vmul.f32 %v348, %v367
        %v370 = vadd.f32 %v344, %v368
        %v371 = vadd.f32 %v345, %v369
        %372 = vset.pattern.permute.xlu0 3
        %373 = vperm.xlu0 %372, %v293
        %v374 = vpop.permute.xlu0 %373
        %v376 = vlaneseq
        %v377 = vshrl.u32 %v376, 7
        %v378 = vsub.s32 3, %v377
        %v379 = vrot.slane %v292, %v378
        %v380 = vlaneseq
        %v381 = vshrl.u32 %v380, 7
        %v382 = vsub.s32 7, %v381
        %v383 = vrot.slane %v292, %v382
        %v386 = vlaneseq
        %v387 = vshrl.u32 %v386, 7
        %v388 = vsub.s32 3, %v387
        %v389 = vrot.slane %v379, %v388
        %v390 = vlaneseq
        %v391 = vshrl.u32 %v390, 7
        %v392 = vsub.s32 3, %v391
        %v393 = vrot.slane %v383, %v392
        %v394 = vmul.f32 %v374, %v389
        %v395 = vmul.f32 %v374, %v393
        %v396 = vadd.f32 %v370, %v394
        %v397 = vadd.f32 %v371, %v395
        %v398 = vld [vmem:[#allocation3] sm:$0xf]
        %vm399 = vcmask 1043456
        %v400 = vsel %vm399, %v396, 0.0
        %v401 = vsel %vm399, %v397, 0.0
        %v402 = vadd.f32 %v400, %v401
        %403 = vadd.xlane.f32.xlu0 %v402
        %v404 = vpop.xlane.xlu0 %403
        %v405 = vadd.f32 %v398, %v404
        %vm406 = vcmask 3072
        %407 = vst.msk [vmem:[#allocation3] sm:$0xf] %vm406, %v405
        %v408 = vld [vmem:[#allocation4] sm:$0xf]
        %v409 = vmul.f32 %v396, %v396
        %v410 = vmul.f32 %v397, %v397
        %v411 = vsel %vm399, %v409, 0.0
        %v412 = vsel %vm399, %v410, 0.0
        %v413 = vadd.f32 %v411, %v412
        %414 = vadd.xlane.f32.xlu0 %v413
        %v415 = vpop.xlane.xlu0 %414
        %v416 = vadd.f32 %v408, %v415
        %417 = vst.msk [vmem:[#allocation4] sm:$0xf] %vm406, %v416
        %v420 = vcombine.low %v396, %v397
        %s422 = smul.u32 %s28, 2
        %s423 = smul.addr %s422, 4
        %s424 = scalar_lea.vmem [#allocation2], %s423
        %425 = vst [vmem:[%s424] sm:$0xff] %v420
        %p426 = scmp.eq.s32.totalorder %s28, 3
        // Predicated region
        $region53: #{tpu_custom_call.1} parent=43 // pred_check
          %p427 = pneg %p426
        $region54: #{tpu_custom_call.1} parent=43 // pred_check_branch
          %429 = sbr.rel (%p427) target = $region56
        $region55: #{tpu_custom_call.1} parent=43 // pred_region
          %v430 = vld [vmem:[#allocation3] sm:$0xf]
          %v431 = vmul.f32 %v430, 0.0009765625
          %v432 = vld [vmem:[#allocation4] sm:$0xf]
          %v433 = vmul.f32 %v432, 0.0009765625
          %v434 = vmul.f32 %v431, %v431
          %v435 = vsub.f32 %v433, %v434
          %v436 = vmax.f32 %v435, 0.0
          %v437 = vld [vmem:[%s2] sm:$0xf]
          %v438 = vadd.f32 %v436, 1e-05
          %v439 = vrsqrt.pop %v438
          %v440 = vmul.f32 %v437, %v439
          %v441 = vld [vmem:[%s3] sm:$0xf]
          %v442 = vmul.f32 %v440, %v431
          %v443 = vsub.f32 %v441, %v442
          %v444 = vld [vmem:[%s4] sm:$0xf]
          %v445 = vld [vmem:[%s5] sm:$0xf]
          %v446 = vld [vmem:[#allocation2] sm:$0xff]
          %448 = vset.pattern.permute.xlu0 0
          %449 = vperm.xlu0 %448, %v440
          %v450 = vpop.permute.xlu0 %449
          %v452 = vunpack.c.l.s4 839922192
          %v453 = vunpack.c.0.s8 %v452
          %v454 = vlaneseq
          %v455 = vshrl.u32 %v454, 7
          %v456 = vsub.s32 %v453, %v455
          %v457 = vrot.slane %v450, %v456
          %v459 = vmul.f32 %v446, %v457
          %461 = vset.pattern.permute.xlu0 0
          %462 = vperm.xlu0 %461, %v443
          %v463 = vpop.permute.xlu0 %462
          %v465 = vunpack.c.l.s4 839922192
          %v466 = vunpack.c.0.s8 %v465
          %v467 = vlaneseq
          %v468 = vshrl.u32 %v467, 7
          %v469 = vsub.s32 %v466, %v468
          %v470 = vrot.slane %v463, %v469
          %v472 = vadd.f32 %v459, %v470
          %v473 = vmul.f32 %v472, 0.01
          %v474 = vmax.f32 %v472, %v473
          %476 = vset.pattern.permute.xlu0 0
          %477 = vperm.xlu0 %476, %v444
          %v478 = vpop.permute.xlu0 %477
          %v481 = vlaneseq
          %v482 = vshrl.u32 %v481, 7
          %v483 = vsub.s32 0, %v482
          %v484 = vrot.slane %v474, %v483
          %v485 = vlaneseq
          %v486 = vshrl.u32 %v485, 7
          %v487 = vsub.s32 4, %v486
          %v488 = vrot.slane %v474, %v487
          %v491 = vlaneseq
          %v492 = vshrl.u32 %v491, 7
          %v493 = vsub.s32 0, %v492
          %v494 = vrot.slane %v484, %v493
          %v495 = vlaneseq
          %v496 = vshrl.u32 %v495, 7
          %v497 = vsub.s32 0, %v496
          %v498 = vrot.slane %v488, %v497
          %v499 = vmul.f32 %v478, %v494
          %v500 = vmul.f32 %v478, %v498
          %501 = vset.pattern.permute.xlu0 1
          %502 = vperm.xlu0 %501, %v444
          %v503 = vpop.permute.xlu0 %502
          %v505 = vlaneseq
          %v506 = vshrl.u32 %v505, 7
          %v507 = vsub.s32 1, %v506
          %v508 = vrot.slane %v474, %v507
          %v509 = vlaneseq
          %v510 = vshrl.u32 %v509, 7
          %v511 = vsub.s32 5, %v510
          %v512 = vrot.slane %v474, %v511
          %v515 = vlaneseq
          %v516 = vshrl.u32 %v515, 7
          %v517 = vsub.s32 1, %v516
          %v518 = vrot.slane %v508, %v517
          %v519 = vlaneseq
          %v520 = vshrl.u32 %v519, 7
          %v521 = vsub.s32 1, %v520
          %v522 = vrot.slane %v512, %v521
          %v523 = vmul.f32 %v503, %v518
          %v524 = vmul.f32 %v503, %v522
          %v525 = vadd.f32 %v499, %v523
          %v526 = vadd.f32 %v500, %v524
          %527 = vset.pattern.permute.xlu0 2
          %528 = vperm.xlu0 %527, %v444
          %v529 = vpop.permute.xlu0 %528
          %v531 = vlaneseq
          %v532 = vshrl.u32 %v531, 7
          %v533 = vsub.s32 2, %v532
          %v534 = vrot.slane %v474, %v533
          %v535 = vlaneseq
          %v536 = vshrl.u32 %v535, 7
          %v537 = vsub.s32 6, %v536
          %v538 = vrot.slane %v474, %v537
          %v541 = vlaneseq
          %v542 = vshrl.u32 %v541, 7
          %v543 = vsub.s32 2, %v542
          %v544 = vrot.slane %v534, %v543
          %v545 = vlaneseq
          %v546 = vshrl.u32 %v545, 7
          %v547 = vsub.s32 2, %v546
          %v548 = vrot.slane %v538, %v547
          %v549 = vmul.f32 %v529, %v544
          %v550 = vmul.f32 %v529, %v548
          %v551 = vadd.f32 %v525, %v549
          %v552 = vadd.f32 %v526, %v550
          %553 = vset.pattern.permute.xlu0 3
          %554 = vperm.xlu0 %553, %v444
          %v555 = vpop.permute.xlu0 %554
          %v557 = vlaneseq
          %v558 = vshrl.u32 %v557, 7
          %v559 = vsub.s32 3, %v558
          %v560 = vrot.slane %v474, %v559
          %v561 = vlaneseq
          %v562 = vshrl.u32 %v561, 7
          %v563 = vsub.s32 7, %v562
          %v564 = vrot.slane %v474, %v563
          %v567 = vlaneseq
          %v568 = vshrl.u32 %v567, 7
          %v569 = vsub.s32 3, %v568
          %v570 = vrot.slane %v560, %v569
          %v571 = vlaneseq
          %v572 = vshrl.u32 %v571, 7
          %v573 = vsub.s32 3, %v572
          %v574 = vrot.slane %v564, %v573
          %v575 = vmul.f32 %v555, %v570
          %v576 = vmul.f32 %v555, %v574
          %v577 = vadd.f32 %v551, %v575
          %v578 = vadd.f32 %v552, %v576
          %580 = vset.pattern.permute.xlu0 0
          %581 = vperm.xlu0 %580, %v445
          %v582 = vpop.permute.xlu0 %581
          %v584 = vadd.f32 %v577, %v582
          %v585 = vadd.f32 %v578, %v582
          %v586 = vmul.f32 %v584, 0.5
          %v587 = vmul.f32 %v585, 0.5
          %v588 = vtanh.pop %v586
          %v589 = vtanh.pop %v587
          %v590 = vmul.f32 %v588, 0.5
          %v591 = vmul.f32 %v589, 0.5
          %v592 = vadd.f32 %v590, 0.5
          %v593 = vadd.f32 %v591, 0.5
          %v596 = vcombine.low %v592, %v593
          %598 = vst [vmem:[%s283] sm:$0xff] %v596
          %s599 = scalar_lea.vmem [#allocation2], 8
          %v600 = vld [vmem:[%s599] sm:$0xff]
          %v601 = vmul.f32 %v600, %v457
          %v602 = vadd.f32 %v601, %v470
          %v603 = vmul.f32 %v602, 0.01
          %v604 = vmax.f32 %v602, %v603
          %v606 = vlaneseq
          %v607 = vshrl.u32 %v606, 7
          %v608 = vsub.s32 0, %v607
          %v609 = vrot.slane %v604, %v608
          %v610 = vlaneseq
          %v611 = vshrl.u32 %v610, 7
          %v612 = vsub.s32 4, %v611
          %v613 = vrot.slane %v604, %v612
          %v616 = vlaneseq
          %v617 = vshrl.u32 %v616, 7
          %v618 = vsub.s32 0, %v617
          %v619 = vrot.slane %v609, %v618
          %v620 = vlaneseq
          %v621 = vshrl.u32 %v620, 7
          %v622 = vsub.s32 0, %v621
          %v623 = vrot.slane %v613, %v622
          %v624 = vmul.f32 %v478, %v619
          %v625 = vmul.f32 %v478, %v623
          %v626 = vlaneseq
          %v627 = vshrl.u32 %v626, 7
          %v628 = vsub.s32 1, %v627
          %v629 = vrot.slane %v604, %v628
          %v630 = vlaneseq
          %v631 = vshrl.u32 %v630, 7
          %v632 = vsub.s32 5, %v631
          %v633 = vrot.slane %v604, %v632
          %v636 = vlaneseq
          %v637 = vshrl.u32 %v636, 7
          %v638 = vsub.s32 1, %v637
          %v639 = vrot.slane %v629, %v638
          %v640 = vlaneseq
          %v641 = vshrl.u32 %v640, 7
          %v642 = vsub.s32 1, %v641
          %v643 = vrot.slane %v633, %v642
          %v644 = vmul.f32 %v503, %v639
          %v645 = vmul.f32 %v503, %v643
          %v646 = vadd.f32 %v624, %v644
          %v647 = vadd.f32 %v625, %v645
          %v648 = vlaneseq
          %v649 = vshrl.u32 %v648, 7
          %v650 = vsub.s32 2, %v649
          %v651 = vrot.slane %v604, %v650
          %v652 = vlaneseq
          %v653 = vshrl.u32 %v652, 7
          %v654 = vsub.s32 6, %v653
          %v655 = vrot.slane %v604, %v654
          %v658 = vlaneseq
          %v659 = vshrl.u32 %v658, 7
          %v660 = vsub.s32 2, %v659
          %v661 = vrot.slane %v651, %v660
          %v662 = vlaneseq
          %v663 = vshrl.u32 %v662, 7
          %v664 = vsub.s32 2, %v663
          %v665 = vrot.slane %v655, %v664
          %v666 = vmul.f32 %v529, %v661
          %v667 = vmul.f32 %v529, %v665
          %v668 = vadd.f32 %v646, %v666
          %v669 = vadd.f32 %v647, %v667
          %v670 = vlaneseq
          %v671 = vshrl.u32 %v670, 7
          %v672 = vsub.s32 3, %v671
          %v673 = vrot.slane %v604, %v672
          %v674 = vlaneseq
          %v675 = vshrl.u32 %v674, 7
          %v676 = vsub.s32 7, %v675
          %v677 = vrot.slane %v604, %v676
          %v680 = vlaneseq
          %v681 = vshrl.u32 %v680, 7
          %v682 = vsub.s32 3, %v681
          %v683 = vrot.slane %v673, %v682
          %v684 = vlaneseq
          %v685 = vshrl.u32 %v684, 7
          %v686 = vsub.s32 3, %v685
          %v687 = vrot.slane %v677, %v686
          %v688 = vmul.f32 %v555, %v683
          %v689 = vmul.f32 %v555, %v687
          %v690 = vadd.f32 %v668, %v688
          %v691 = vadd.f32 %v669, %v689
          %v692 = vadd.f32 %v690, %v582
          %v693 = vadd.f32 %v691, %v582
          %v694 = vmul.f32 %v692, 0.5
          %v695 = vmul.f32 %v693, 0.5
          %v696 = vtanh.pop %v694
          %v697 = vtanh.pop %v695
          %v698 = vmul.f32 %v696, 0.5
          %v699 = vmul.f32 %v697, 0.5
          %v700 = vadd.f32 %v698, 0.5
          %v701 = vadd.f32 %v699, 0.5
          %v704 = vcombine.low %v700, %v701
          %706 = vst [vmem:[%s283 + $0x8] sm:$0xff] %v704
          %s707 = scalar_lea.vmem [#allocation2], 16
          %v708 = vld [vmem:[%s707] sm:$0xff]
          %v709 = vmul.f32 %v708, %v457
          %v710 = vadd.f32 %v709, %v470
          %v711 = vmul.f32 %v710, 0.01
          %v712 = vmax.f32 %v710, %v711
          %v714 = vlaneseq
          %v715 = vshrl.u32 %v714, 7
          %v716 = vsub.s32 0, %v715
          %v717 = vrot.slane %v712, %v716
          %v718 = vlaneseq
          %v719 = vshrl.u32 %v718, 7
          %v720 = vsub.s32 4, %v719
          %v721 = vrot.slane %v712, %v720
          %v724 = vlaneseq
          %v725 = vshrl.u32 %v724, 7
          %v726 = vsub.s32 0, %v725
          %v727 = vrot.slane %v717, %v726
          %v728 = vlaneseq
          %v729 = vshrl.u32 %v728, 7
          %v730 = vsub.s32 0, %v729
          %v731 = vrot.slane %v721, %v730
          %v732 = vmul.f32 %v478, %v727
          %v733 = vmul.f32 %v478, %v731
          %v734 = vlaneseq
          %v735 = vshrl.u32 %v734, 7
          %v736 = vsub.s32 1, %v735
          %v737 = vrot.slane %v712, %v736
          %v738 = vlaneseq
          %v739 = vshrl.u32 %v738, 7
          %v740 = vsub.s32 5, %v739
          %v741 = vrot.slane %v712, %v740
          %v744 = vlaneseq
          %v745 = vshrl.u32 %v744, 7
          %v746 = vsub.s32 1, %v745
          %v747 = vrot.slane %v737, %v746
          %v748 = vlaneseq
          %v749 = vshrl.u32 %v748, 7
          %v750 = vsub.s32 1, %v749
          %v751 = vrot.slane %v741, %v750
          %v752 = vmul.f32 %v503, %v747
          %v753 = vmul.f32 %v503, %v751
          %v754 = vadd.f32 %v732, %v752
          %v755 = vadd.f32 %v733, %v753
          %v756 = vlaneseq
          %v757 = vshrl.u32 %v756, 7
          %v758 = vsub.s32 2, %v757
          %v759 = vrot.slane %v712, %v758
          %v760 = vlaneseq
          %v761 = vshrl.u32 %v760, 7
          %v762 = vsub.s32 6, %v761
          %v763 = vrot.slane %v712, %v762
          %v766 = vlaneseq
          %v767 = vshrl.u32 %v766, 7
          %v768 = vsub.s32 2, %v767
          %v769 = vrot.slane %v759, %v768
          %v770 = vlaneseq
          %v771 = vshrl.u32 %v770, 7
          %v772 = vsub.s32 2, %v771
          %v773 = vrot.slane %v763, %v772
          %v774 = vmul.f32 %v529, %v769
          %v775 = vmul.f32 %v529, %v773
          %v776 = vadd.f32 %v754, %v774
          %v777 = vadd.f32 %v755, %v775
          %v778 = vlaneseq
          %v779 = vshrl.u32 %v778, 7
          %v780 = vsub.s32 3, %v779
          %v781 = vrot.slane %v712, %v780
          %v782 = vlaneseq
          %v783 = vshrl.u32 %v782, 7
          %v784 = vsub.s32 7, %v783
          %v785 = vrot.slane %v712, %v784
          %v788 = vlaneseq
          %v789 = vshrl.u32 %v788, 7
          %v790 = vsub.s32 3, %v789
          %v791 = vrot.slane %v781, %v790
          %v792 = vlaneseq
          %v793 = vshrl.u32 %v792, 7
          %v794 = vsub.s32 3, %v793
          %v795 = vrot.slane %v785, %v794
          %v796 = vmul.f32 %v555, %v791
          %v797 = vmul.f32 %v555, %v795
          %v798 = vadd.f32 %v776, %v796
          %v799 = vadd.f32 %v777, %v797
          %v800 = vadd.f32 %v798, %v582
          %v801 = vadd.f32 %v799, %v582
          %v802 = vmul.f32 %v800, 0.5
          %v803 = vmul.f32 %v801, 0.5
          %v804 = vtanh.pop %v802
          %v805 = vtanh.pop %v803
          %v806 = vmul.f32 %v804, 0.5
          %v807 = vmul.f32 %v805, 0.5
          %v808 = vadd.f32 %v806, 0.5
          %v809 = vadd.f32 %v807, 0.5
          %v812 = vcombine.low %v808, %v809
          %814 = vst [vmem:[%s283 + $0x10] sm:$0xff] %v812
          %s815 = scalar_lea.vmem [#allocation2], 24
          %v816 = vld [vmem:[%s815] sm:$0xff]
          %v817 = vmul.f32 %v816, %v457
          %v818 = vadd.f32 %v817, %v470
          %v819 = vmul.f32 %v818, 0.01
          %v820 = vmax.f32 %v818, %v819
          %v822 = vlaneseq
          %v823 = vshrl.u32 %v822, 7
          %v824 = vsub.s32 0, %v823
          %v825 = vrot.slane %v820, %v824
          %v826 = vlaneseq
          %v827 = vshrl.u32 %v826, 7
          %v828 = vsub.s32 4, %v827
          %v829 = vrot.slane %v820, %v828
          %v832 = vlaneseq
          %v833 = vshrl.u32 %v832, 7
          %v834 = vsub.s32 0, %v833
          %v835 = vrot.slane %v825, %v834
          %v836 = vlaneseq
          %v837 = vshrl.u32 %v836, 7
          %v838 = vsub.s32 0, %v837
          %v839 = vrot.slane %v829, %v838
          %v840 = vmul.f32 %v478, %v835
          %v841 = vmul.f32 %v478, %v839
          %v842 = vlaneseq
          %v843 = vshrl.u32 %v842, 7
          %v844 = vsub.s32 1, %v843
          %v845 = vrot.slane %v820, %v844
          %v846 = vlaneseq
          %v847 = vshrl.u32 %v846, 7
          %v848 = vsub.s32 5, %v847
          %v849 = vrot.slane %v820, %v848
          %v852 = vlaneseq
          %v853 = vshrl.u32 %v852, 7
          %v854 = vsub.s32 1, %v853
          %v855 = vrot.slane %v845, %v854
          %v856 = vlaneseq
          %v857 = vshrl.u32 %v856, 7
          %v858 = vsub.s32 1, %v857
          %v859 = vrot.slane %v849, %v858
          %v860 = vmul.f32 %v503, %v855
          %v861 = vmul.f32 %v503, %v859
          %v862 = vadd.f32 %v840, %v860
          %v863 = vadd.f32 %v841, %v861
          %v864 = vlaneseq
          %v865 = vshrl.u32 %v864, 7
          %v866 = vsub.s32 2, %v865
          %v867 = vrot.slane %v820, %v866
          %v868 = vlaneseq
          %v869 = vshrl.u32 %v868, 7
          %v870 = vsub.s32 6, %v869
          %v871 = vrot.slane %v820, %v870
          %v874 = vlaneseq
          %v875 = vshrl.u32 %v874, 7
          %v876 = vsub.s32 2, %v875
          %v877 = vrot.slane %v867, %v876
          %v878 = vlaneseq
          %v879 = vshrl.u32 %v878, 7
          %v880 = vsub.s32 2, %v879
          %v881 = vrot.slane %v871, %v880
          %v882 = vmul.f32 %v529, %v877
          %v883 = vmul.f32 %v529, %v881
          %v884 = vadd.f32 %v862, %v882
          %v885 = vadd.f32 %v863, %v883
          %v886 = vlaneseq
          %v887 = vshrl.u32 %v886, 7
          %v888 = vsub.s32 3, %v887
          %v889 = vrot.slane %v820, %v888
          %v890 = vlaneseq
          %v891 = vshrl.u32 %v890, 7
          %v892 = vsub.s32 7, %v891
          %v893 = vrot.slane %v820, %v892
          %v896 = vlaneseq
          %v897 = vshrl.u32 %v896, 7
          %v898 = vsub.s32 3, %v897
          %v899 = vrot.slane %v889, %v898
          %v900 = vlaneseq
          %v901 = vshrl.u32 %v900, 7
          %v902 = vsub.s32 3, %v901
          %v903 = vrot.slane %v893, %v902
          %v904 = vmul.f32 %v555, %v899
          %v905 = vmul.f32 %v555, %v903
          %v906 = vadd.f32 %v884, %v904
          %v907 = vadd.f32 %v885, %v905
          %v908 = vadd.f32 %v906, %v582
          %v909 = vadd.f32 %v907, %v582
          %v910 = vmul.f32 %v908, 0.5
          %v911 = vmul.f32 %v909, 0.5
          %v912 = vtanh.pop %v910
          %v913 = vtanh.pop %v911
          %v914 = vmul.f32 %v912, 0.5
          %v915 = vmul.f32 %v913, 0.5
          %v916 = vadd.f32 %v914, 0.5
          %v917 = vadd.f32 %v915, 0.5
          %v920 = vcombine.low %v916, %v917
          %922 = vst [vmem:[%s283 + $0x18] sm:$0xff] %v920
        $region56: #{tpu_custom_call.1} parent=43 // pred_fallthru
          _
        %s923 = sand.u32 %s176, 1
        %s924 = scalar_lea.sflag [#allocation7], %s923
        %s925 = sand.u32 %s176, 1
        %s926 = smul.addr %s925, 32
        %s927 = scalar_lea.vmem [#allocation8], %s926
        // Predicated region
        $region57: #{tpu_custom_call.1} parent=43 // pred_check
          %p928 = pneg %p186
        $region58: #{tpu_custom_call.1} parent=43 // pred_check_branch
          %930 = sbr.rel (%p928) target = $region60
        $region59: #{tpu_custom_call.1} parent=43 // pred_region
          %s932 = ssub.s32 512, 512
          %933 = vsyncadd %s924, %s932
          %s934 = smul.addr %s27, 8
          %s935 = smul.addr %s934, 64
          %s936 = scalar_lea.hbm %s6, %s935
          %s938 = sshll.u32 %s927, 4
          %s939 = int_to_ptr.vmem [resolvable:$true] %s938
          %941 = dma.vmem_to_hbm [thread:$0]  %s939, 512, %s936, %s924
        $region60: #{tpu_custom_call.1} parent=43 // pred_fallthru
          _
      $region44: #{tpu_custom_call.1} parent=5 // pred_fallthru
        _
      %p942 = scmp.le.s32.totalorder 2, %s18
      // Predicated region
      $region61: #{tpu_custom_call.1} parent=5 // pred_check
        %p943 = pneg %p942
      $region62: #{tpu_custom_call.1} parent=5 // pred_check_branch
        %945 = sbr.rel (%p943) target = $region64
      $region63: #{tpu_custom_call.1} parent=5 // pred_region
        %s946 = ssub.s32 %s18, 2
        // Predicated region
        $region65: #{tpu_custom_call.1} parent=63 // pred_check
          %p947 = pneg %p192
        $region66: #{tpu_custom_call.1} parent=63 // pred_check_branch
          %949 = sbr.rel (%p947) target = $region68
        $region67: #{tpu_custom_call.1} parent=63 // pred_region
          %s950 = sand.u32 %s177, 1
          %s951 = scalar_lea.sflag [#allocation7], %s950
          %s952 = sand.u32 %s177, 1
          %s953 = smul.addr %s952, 32
          %s954 = scalar_lea.vmem [#allocation8], %s953
          %955 = dma.done %s951, 512
        $region68: #{tpu_custom_call.1} parent=63 // pred_fallthru
          _
      $region64: #{tpu_custom_call.1} parent=5 // pred_fallthru
        _
    $region6: #{tpu_custom_call.1} parent=1 // loop_footer
      %s22 = sadd.s32 1, %s18
    $region7: #{tpu_custom_call.1} parent=1 // loop_footer_branch
      %17 = sbr.rel target = $region3
    $region8: #{tpu_custom_call.1} parent=1 // loop_exit
      _
    %956 = vsyncpa [#allocation6], 1
    %s957 = scalar_lea.sflag [#allocation6], 1
    %958 = vsyncpa %s957, 1
    %959 = vsyncpa [#allocation7], 1
    %s960 = scalar_lea.sflag [#allocation7], 1
    %961 = vsyncpa %s960, 1

</llo_original>
